<compile_context>
chip_gen: v7x
topology: tpu7x:2x2x1
jax: 0.10.0
libtpu: 0.0.40
codegen_flags: <defaults>
</compile_context>

<pallas_src>
import functools

import jax
import jax.numpy as jnp
from jax import lax
from jax.experimental import pallas as pl
from jax.experimental.pallas import tpu as pltpu


def _round_up(x, m):
    return (x + m - 1) // m * m


def _lstm_fc_kernel(emb_ref, state_ref, w_ih_ref, w_hh_ref, b_ref,
                    w_fch_ref, w_fcs_ref, b_fc_ref, out_ref, gx_scr,
                    *, T, Bp, Hp):
    """Hoisted input projection + LSTM recurrence + concat-free FC.

    emb_ref  : [T*Bp, Hp]   time-major, flattened, lane-padded embedded instruction
    state_ref: [Bp, Ip]     lane-padded state
    w_ih_ref : [Hp, 4*Hp]   gate blocks (i, f, g, o) at 128-lane boundaries
    w_hh_ref : [Hp, 4*Hp]
    b_ref    : [1, 4*Hp]    b_ih + b_hh, gate-block padded
    w_fch_ref: [Hp, Op]     fc weight, hidden part
    w_fcs_ref: [Ip, Op]     fc weight, state part
    b_fc_ref : [1, Op]
    out_ref  : [Bp, Op]     lane-dense output
    gx_scr   : VMEM [T*Bp, 4*Hp] precomputed input-gate projections
    """
    # ---- Phase 1: one big MXU matmul for all T timesteps (bias folded in). ----
    gx_scr[...] = (jnp.dot(emb_ref[...], w_ih_ref[...],
                           preferred_element_type=jnp.float32)
                   + b_ref[...])

    w_hh = w_hh_ref[...]
    h0 = jnp.zeros((Bp, Hp), jnp.float32)
    c0 = jnp.zeros((Bp, Hp), jnp.float32)

    # ---- Phase 2: serial recurrence; only the h @ W_hh matmul per step. ----
    def step(t, carry):
        h, c = carry
        row = pl.multiple_of(t * Bp, Bp)
        gates = gx_scr[pl.ds(row, Bp), :] + jnp.dot(
            h, w_hh, preferred_element_type=jnp.float32)          # [Bp, 4*Hp]
        # PyTorch gate order: input, forget, cell(g), output; 128-lane aligned slices.
        i_g = jax.nn.sigmoid(gates[:, 0 * Hp:1 * Hp])
        f_g = jax.nn.sigmoid(gates[:, 1 * Hp:2 * Hp])
        g_g = jnp.tanh(gates[:, 2 * Hp:3 * Hp])
        o_g = jax.nn.sigmoid(gates[:, 3 * Hp:4 * Hp])
        c_new = f_g * c + i_g * g_g
        h_new = o_g * jnp.tanh(c_new)
        return (h_new, c_new)

    h_last, _ = lax.fori_loop(0, T, step, (h0, c0), unroll=True)

    # ---- Phase 3: concat-free FC: h @ W_fc_h + state @ W_fc_s + b_fc. ----
    # (dropout is eval-mode identity here)
    out = (jnp.dot(h_last, w_fch_ref[...], preferred_element_type=jnp.float32)
           + jnp.dot(state_ref[...], w_fcs_ref[...],
                     preferred_element_type=jnp.float32)
           + b_fc_ref[...])
    out_ref[...] = out.astype(out_ref.dtype)


def prepare_params(params):
    """One-time packing: transpose, split fc, fuse biases, pad to lane boundaries."""
    emb = params["embedding"]                        # [V, H]
    w_ih, w_hh = params["w_ih"], params["w_hh"]      # [4H, H] (PyTorch layout)
    b = params["b_ih"] + params["b_hh"]              # [4H]
    w_fc, b_fc = params["w_fc"], params["b_fc"]      # [O, H+I], [O]

    V, H = emb.shape
    O, HI = w_fc.shape
    I = HI - H
    Hp, Ip, Op = _round_up(H, 128), _round_up(I, 128), _round_up(O, 128)

    def pack_gate_w(w):                              # [4H, H] -> [Hp, 4*Hp]
        out = jnp.zeros((Hp, 4 * Hp), jnp.float32)
        for k in range(4):
            out = out.at[:H, k * Hp:k * Hp + H].set(w[k * H:(k + 1) * H, :].T)
        return out

    def pack_gate_b(v):                              # [4H] -> [1, 4*Hp]
        out = jnp.zeros((4 * Hp,), jnp.float32)
        for k in range(4):
            out = out.at[k * Hp:k * Hp + H].set(v[k * H:(k + 1) * H])
        return out.reshape(1, 4 * Hp)

    packed = {
        "emb_p": jnp.zeros((V, Hp), jnp.float32).at[:, :H].set(emb),
        "w_ih_p": pack_gate_w(w_ih),
        "w_hh_p": pack_gate_w(w_hh),
        "b_p": pack_gate_b(b),
        "w_fch": jnp.zeros((Hp, Op), jnp.float32).at[:H, :O].set(w_fc[:, :H].T),
        "w_fcs": jnp.zeros((Ip, Op), jnp.float32).at[:I, :O].set(w_fc[:, H:].T),
        "b_fc_p": jnp.zeros((1, Op), jnp.float32).at[0, :O].set(b_fc),
    }
    dims = (H, I, O, Hp, Ip, Op)
    return packed, dims


@functools.partial(jax.jit, static_argnames=("dims",))
def instruction_following_forward(packed, instruction, state, *, dims):
    """instruction: int32 [B, T] token ids; state: float32 [B, input_size]."""
    H, I, O, Hp, Ip, Op = dims
    B, T = instruction.shape
    Bp = _round_up(B, 8)

    # Time-major gather: index with ids.T so only the tiny int32 id matrix is
    # transposed, never the [T, B, H] activation tensor.
    emb_tm = jnp.take(packed["emb_p"], instruction.T, axis=0)      # [T, B, Hp]
    emb_tm = jnp.pad(emb_tm, ((0, 0), (0, Bp - B), (0, 0)))        # [T, Bp, Hp]
    emb_flat = emb_tm.reshape(T * Bp, Hp)

    state_p = jnp.zeros((Bp, Ip), jnp.float32).at[:B, :I].set(state)

    vmem = functools.partial(pl.BlockSpec, memory_space=pltpu.MemorySpace.VMEM)
    kernel = functools.partial(_lstm_fc_kernel, T=T, Bp=Bp, Hp=Hp)

    out_p = pl.pallas_call(
        kernel,
        out_shape=jax.ShapeDtypeStruct((Bp, Op), jnp.float32),
        in_specs=[vmem()] * 8,
        out_specs=vmem(),
        scratch_shapes=[pltpu.VMEM((T * Bp, 4 * Hp), jnp.float32)],
        compiler_params=pltpu.CompilerParams(vmem_limit_bytes=32 * 1024 * 1024),
    )(emb_flat, state_p, packed["w_ih_p"], packed["w_hh_p"], packed["b_p"],
      packed["w_fch"], packed["w_fcs"], packed["b_fc_p"])

    return out_p[:B, :O]


def _reference_forward(params, instruction, state):
    """Pure-JAX reference mirroring the PyTorch module (eval mode)."""
    emb = jnp.take(params["embedding"], instruction, axis=0)  # [B, T, H]
    H = emb.shape[-1]
    B = emb.shape[0]
    w_ih, w_hh = params["w_ih"], params["w_hh"]
    b = params["b_ih"] + params["b_hh"]

    def step(carry, x_t):
        h, c = carry
        gates = x_t @ w_ih.T + h @ w_hh.T + b
        i_g = jax.nn.sigmoid(gates[:, 0 * H:1 * H])
        f_g = jax.nn.sigmoid(gates[:, 1 * H:2 * H])
        g_g = jnp.tanh(gates[:, 2 * H:3 * H])
        o_g = jax.nn.sigmoid(gates[:, 3 * H:4 * H])
        c = f_g * c + i_g * g_g
        h = o_g * jnp.tanh(c)
        return (h, c), None

    h0 = jnp.zeros((B, H), jnp.float32)
    (h_last, _), _ = lax.scan(step, (h0, h0), jnp.transpose(emb, (1, 0, 2)))
    combined = jnp.concatenate([h_last, state], axis=1)
    return combined @ params["w_fc"].T + params["b_fc"]


def make_params(key, input_size, hidden_size, output_size, vocab_size):
    ks = jax.random.split(key, 7)
    s = 0.1
    return {
        "embedding": s * jax.random.normal(ks[0], (vocab_size, hidden_size), jnp.float32),
        "w_ih": s * jax.random.normal(ks[1], (4 * hidden_size, hidden_size), jnp.float32),
        "w_hh": s * jax.random.normal(ks[2], (4 * hidden_size, hidden_size), jnp.float32),
        "b_ih": s * jax.random.normal(ks[3], (4 * hidden_size,), jnp.float32),
        "b_hh": s * jax.random.normal(ks[4], (4 * hidden_size,), jnp.float32),
        "w_fc": s * jax.random.normal(ks[5], (output_size, hidden_size + input_size), jnp.float32),
        "b_fc": s * jax.random.normal(ks[6], (output_size,), jnp.float32),
    }


if __name__ == "__main__":
    # Small, forward-consistent shapes.
    B, T = 2, 8
    input_size, hidden_size, output_size, vocab_size = 16, 32, 8, 50

    key = jax.random.PRNGKey(0)
    k_param, k_instr, k_state = jax.random.split(key, 3)

    params = make_params(k_param, input_size, hidden_size, output_size, vocab_size)
    instruction = jax.random.randint(k_instr, (B, T), 0, vocab_size, dtype=jnp.int32)
    state = jax.random.normal(k_state, (B, input_size), jnp.float32)

    packed, dims = prepare_params(params)   # one-time weight packing (not per forward)
    out = instruction_following_forward(packed, instruction, state, dims=dims)
    out = jax.block_until_ready(out)

    ref = _reference_forward(params, instruction, state)
    assert out.shape == (B, output_size)
    assert jnp.allclose(out, ref, rtol=1e-3, atol=1e-4), "mismatch vs pure-JAX reference"

    print("KERNEL_OK")
</pallas_src>

<mosaic_0001>
module attributes {stable_mosaic.version = 11 : i64} {
  func.func @_lstm_fc_kernel(%arg0: memref<64x128xf32, #tpu.memory_space<vmem>>, %arg1: memref<8x128xf32, #tpu.memory_space<vmem>>, %arg2: memref<128x512xf32, #tpu.memory_space<vmem>>, %arg3: memref<128x512xf32, #tpu.memory_space<vmem>>, %arg4: memref<1x512xf32, #tpu.memory_space<vmem>>, %arg5: memref<128x128xf32, #tpu.memory_space<vmem>>, %arg6: memref<128x128xf32, #tpu.memory_space<vmem>>, %arg7: memref<1x128xf32, #tpu.memory_space<vmem>>, %arg8: memref<8x128xf32, #tpu.memory_space<vmem>>, %arg9: memref<64x512xf32, #tpu.memory_space<vmem>>) attributes {dimension_semantics = [], scalar_prefetch = 0 : i64, scratch_operands = 1 : i64, tpu.core_type = #tpu.core_type<tc>} {
    %c0 = arith.constant 0 : index
    %c0_0 = arith.constant 0 : index
    %0 = vector.load %arg0[%c0, %c0_0] : memref<64x128xf32, #tpu.memory_space<vmem>>, vector<64x128xf32>
    %c0_1 = arith.constant 0 : index
    %c0_2 = arith.constant 0 : index
    %1 = vector.load %arg2[%c0_1, %c0_2] : memref<128x512xf32, #tpu.memory_space<vmem>>, vector<128x512xf32>
    %cst = arith.constant dense<0.000000e+00> : vector<64x512xf32>
    %2 = tpu.matmul %0, %1, %cst {dimension_numbers = #tpu.dot_dimension_numbers<[1], [0], [0], [1], [0, 0, 1, 1], [], []>} : vector<64x128xf32>, vector<128x512xf32>, vector<64x512xf32> -> vector<64x512xf32>
    %c0_3 = arith.constant 0 : index
    %c0_4 = arith.constant 0 : index
    %3 = vector.load %arg4[%c0_3, %c0_4] : memref<1x512xf32, #tpu.memory_space<vmem>>, vector<1x512xf32>
    %4 = vector.broadcast %3 : vector<1x512xf32> to vector<64x512xf32>
    %5 = arith.addf %2, %4 : vector<64x512xf32>
    %c0_5 = arith.constant 0 : index
    %c0_6 = arith.constant 0 : index
    %6 = vector.load %arg9[%c0_5, %c0_6] : memref<64x512xf32, #tpu.memory_space<vmem>>, vector<64x512xf32>
    tpu.vector_store %arg9[%c0_5, %c0_6], %5 {strides = array<i32>} : memref<64x512xf32, #tpu.memory_space<vmem>>, vector<64x512xf32>,
    %c0_7 = arith.constant 0 : index
    %c0_8 = arith.constant 0 : index
    %7 = vector.load %arg3[%c0_7, %c0_8] : memref<128x512xf32, #tpu.memory_space<vmem>>, vector<128x512xf32>
    %cst_9 = arith.constant 0.000000e+00 : f32
    %8 = vector.broadcast %cst_9 : f32 to vector<8x128xf32>
    %cst_10 = arith.constant 0.000000e+00 : f32
    %9 = vector.broadcast %cst_10 : f32 to vector<8x128xf32>
    %c0_i32 = arith.constant 0 : i32
    %c8_i32 = arith.constant 8 : i32
    %10 = arith.muli %c0_i32, %c8_i32 : i32
    %11 = tpu.assume_multiple %10, 8 : i32
    %12 = arith.index_cast %11 : i32 to index
    %c0_11 = arith.constant 0 : index
    %13 = vector.load %arg9[%12, %c0_11] : memref<64x512xf32, #tpu.memory_space<vmem>>, vector<8x512xf32>
    %cst_12 = arith.constant dense<0.000000e+00> : vector<8x512xf32>
    %14 = tpu.matmul %8, %7, %cst_12 {dimension_numbers = #tpu.dot_dimension_numbers<[1], [0], [0], [1], [0, 0, 1, 1], [], []>} : vector<8x128xf32>, vector<128x512xf32>, vector<8x512xf32> -> vector<8x512xf32>
    %15 = arith.addf %13, %14 : vector<8x512xf32>
    %16 = vector.extract_strided_slice %15 {offsets = [0, 0], sizes = [8, 128], strides = [1, 1]} : vector<8x512xf32> to vector<8x128xf32>
    %17 = arith.negf %16 : vector<8x128xf32>
    %18 = math.exp %17 : vector<8x128xf32>
    %cst_13 = arith.constant 1.000000e+00 : f32
    %19 = vector.broadcast %cst_13 : f32 to vector<8x128xf32>
    %20 = arith.addf %19, %18 : vector<8x128xf32>
    %21 = arith.divf %19, %20 : vector<8x128xf32>
    %22 = vector.extract_strided_slice %15 {offsets = [0, 128], sizes = [8, 128], strides = [1, 1]} : vector<8x512xf32> to vector<8x128xf32>
    %23 = arith.negf %22 : vector<8x128xf32>
    %24 = math.exp %23 : vector<8x128xf32>
    %cst_14 = arith.constant 1.000000e+00 : f32
    %25 = vector.broadcast %cst_14 : f32 to vector<8x128xf32>
    %26 = arith.addf %25, %24 : vector<8x128xf32>
    %27 = arith.divf %25, %26 : vector<8x128xf32>
    %28 = vector.extract_strided_slice %15 {offsets = [0, 256], sizes = [8, 128], strides = [1, 1]} : vector<8x512xf32> to vector<8x128xf32>
    %29 = math.tanh %28 : vector<8x128xf32>
    %30 = vector.extract_strided_slice %15 {offsets = [0, 384], sizes = [8, 128], strides = [1, 1]} : vector<8x512xf32> to vector<8x128xf32>
    %31 = arith.negf %30 : vector<8x128xf32>
    %32 = math.exp %31 : vector<8x128xf32>
    %cst_15 = arith.constant 1.000000e+00 : f32
    %33 = vector.broadcast %cst_15 : f32 to vector<8x128xf32>
    %34 = arith.addf %33, %32 : vector<8x128xf32>
    %35 = arith.divf %33, %34 : vector<8x128xf32>
    %36 = arith.mulf %27, %9 : vector<8x128xf32>
    %37 = arith.mulf %21, %29 : vector<8x128xf32>
    %38 = arith.addf %36, %37 : vector<8x128xf32>
    %39 = math.tanh %38 : vector<8x128xf32>
    %40 = arith.mulf %35, %39 : vector<8x128xf32>
    %c1_i32 = arith.constant 1 : i32
    %c8_i32_16 = arith.constant 8 : i32
    %41 = arith.muli %c1_i32, %c8_i32_16 : i32
    %42 = tpu.assume_multiple %41, 8 : i32
    %43 = arith.index_cast %42 : i32 to index
    %c0_17 = arith.constant 0 : index
    %44 = vector.load %arg9[%43, %c0_17] : memref<64x512xf32, #tpu.memory_space<vmem>>, vector<8x512xf32>
    %cst_18 = arith.constant dense<0.000000e+00> : vector<8x512xf32>
    %45 = tpu.matmul %40, %7, %cst_18 {dimension_numbers = #tpu.dot_dimension_numbers<[1], [0], [0], [1], [0, 0, 1, 1], [], []>} : vector<8x128xf32>, vector<128x512xf32>, vector<8x512xf32> -> vector<8x512xf32>
    %46 = arith.addf %44, %45 : vector<8x512xf32>
    %47 = vector.extract_strided_slice %46 {offsets = [0, 0], sizes = [8, 128], strides = [1, 1]} : vector<8x512xf32> to vector<8x128xf32>
    %48 = arith.negf %47 : vector<8x128xf32>
    %49 = math.exp %48 : vector<8x128xf32>
    %cst_19 = arith.constant 1.000000e+00 : f32
    %50 = vector.broadcast %cst_19 : f32 to vector<8x128xf32>
    %51 = arith.addf %50, %49 : vector<8x128xf32>
    %52 = arith.divf %50, %51 : vector<8x128xf32>
    %53 = vector.extract_strided_slice %46 {offsets = [0, 128], sizes = [8, 128], strides = [1, 1]} : vector<8x512xf32> to vector<8x128xf32>
    %54 = arith.negf %53 : vector<8x128xf32>
    %55 = math.exp %54 : vector<8x128xf32>
    %cst_20 = arith.constant 1.000000e+00 : f32
    %56 = vector.broadcast %cst_20 : f32 to vector<8x128xf32>
    %57 = arith.addf %56, %55 : vector<8x128xf32>
    %58 = arith.divf %56, %57 : vector<8x128xf32>
    %59 = vector.extract_strided_slice %46 {offsets = [0, 256], sizes = [8, 128], strides = [1, 1]} : vector<8x512xf32> to vector<8x128xf32>
    %60 = math.tanh %59 : vector<8x128xf32>
    %61 = vector.extract_strided_slice %46 {offsets = [0, 384], sizes = [8, 128], strides = [1, 1]} : vector<8x512xf32> to vector<8x128xf32>
    %62 = arith.negf %61 : vector<8x128xf32>
    %63 = math.exp %62 : vector<8x128xf32>
    %cst_21 = arith.constant 1.000000e+00 : f32
    %64 = vector.broadcast %cst_21 : f32 to vector<8x128xf32>
    %65 = arith.addf %64, %63 : vector<8x128xf32>
    %66 = arith.divf %64, %65 : vector<8x128xf32>
    %67 = arith.mulf %58, %38 : vector<8x128xf32>
    %68 = arith.mulf %52, %60 : vector<8x128xf32>
    %69 = arith.addf %67, %68 : vector<8x128xf32>
    %70 = math.tanh %69 : vector<8x128xf32>
    %71 = arith.mulf %66, %70 : vector<8x128xf32>
    %c2_i32 = arith.constant 2 : i32
    %c8_i32_22 = arith.constant 8 : i32
    %72 = arith.muli %c2_i32, %c8_i32_22 : i32
    %73 = tpu.assume_multiple %72, 8 : i32
    %74 = arith.index_cast %73 : i32 to index
    %c0_23 = arith.constant 0 : index
    %75 = vector.load %arg9[%74, %c0_23] : memref<64x512xf32, #tpu.memory_space<vmem>>, vector<8x512xf32>
    %cst_24 = arith.constant dense<0.000000e+00> : vector<8x512xf32>
    %76 = tpu.matmul %71, %7, %cst_24 {dimension_numbers = #tpu.dot_dimension_numbers<[1], [0], [0], [1], [0, 0, 1, 1], [], []>} : vector<8x128xf32>, vector<128x512xf32>, vector<8x512xf32> -> vector<8x512xf32>
    %77 = arith.addf %75, %76 : vector<8x512xf32>
    %78 = vector.extract_strided_slice %77 {offsets = [0, 0], sizes = [8, 128], strides = [1, 1]} : vector<8x512xf32> to vector<8x128xf32>
    %79 = arith.negf %78 : vector<8x128xf32>
    %80 = math.exp %79 : vector<8x128xf32>
    %cst_25 = arith.constant 1.000000e+00 : f32
    %81 = vector.broadcast %cst_25 : f32 to vector<8x128xf32>
    %82 = arith.addf %81, %80 : vector<8x128xf32>
    %83 = arith.divf %81, %82 : vector<8x128xf32>
    %84 = vector.extract_strided_slice %77 {offsets = [0, 128], sizes = [8, 128], strides = [1, 1]} : vector<8x512xf32> to vector<8x128xf32>
    %85 = arith.negf %84 : vector<8x128xf32>
    %86 = math.exp %85 : vector<8x128xf32>
    %cst_26 = arith.constant 1.000000e+00 : f32
    %87 = vector.broadcast %cst_26 : f32 to vector<8x128xf32>
    %88 = arith.addf %87, %86 : vector<8x128xf32>
    %89 = arith.divf %87, %88 : vector<8x128xf32>
    %90 = vector.extract_strided_slice %77 {offsets = [0, 256], sizes = [8, 128], strides = [1, 1]} : vector<8x512xf32> to vector<8x128xf32>
    %91 = math.tanh %90 : vector<8x128xf32>
    %92 = vector.extract_strided_slice %77 {offsets = [0, 384], sizes = [8, 128], strides = [1, 1]} : vector<8x512xf32> to vector<8x128xf32>
    %93 = arith.negf %92 : vector<8x128xf32>
    %94 = math.exp %93 : vector<8x128xf32>
    %cst_27 = arith.constant 1.000000e+00 : f32
    %95 = vector.broadcast %cst_27 : f32 to vector<8x128xf32>
    %96 = arith.addf %95, %94 : vector<8x128xf32>
    %97 = arith.divf %95, %96 : vector<8x128xf32>
    %98 = arith.mulf %89, %69 : vector<8x128xf32>
    %99 = arith.mulf %83, %91 : vector<8x128xf32>
    %100 = arith.addf %98, %99 : vector<8x128xf32>
    %101 = math.tanh %100 : vector<8x128xf32>
    %102 = arith.mulf %97, %101 : vector<8x128xf32>
    %c3_i32 = arith.constant 3 : i32
    %c8_i32_28 = arith.constant 8 : i32
    %103 = arith.muli %c3_i32, %c8_i32_28 : i32
    %104 = tpu.assume_multiple %103, 8 : i32
    %105 = arith.index_cast %104 : i32 to index
    %c0_29 = arith.constant 0 : index
    %106 = vector.load %arg9[%105, %c0_29] : memref<64x512xf32, #tpu.memory_space<vmem>>, vector<8x512xf32>
    %cst_30 = arith.constant dense<0.000000e+00> : vector<8x512xf32>
    %107 = tpu.matmul %102, %7, %cst_30 {dimension_numbers = #tpu.dot_dimension_numbers<[1], [0], [0], [1], [0, 0, 1, 1], [], []>} : vector<8x128xf32>, vector<128x512xf32>, vector<8x512xf32> -> vector<8x512xf32>
    %108 = arith.addf %106, %107 : vector<8x512xf32>
    %109 = vector.extract_strided_slice %108 {offsets = [0, 0], sizes = [8, 128], strides = [1, 1]} : vector<8x512xf32> to vector<8x128xf32>
    %110 = arith.negf %109 : vector<8x128xf32>
    %111 = math.exp %110 : vector<8x128xf32>
    %cst_31 = arith.constant 1.000000e+00 : f32
    %112 = vector.broadcast %cst_31 : f32 to vector<8x128xf32>
    %113 = arith.addf %112, %111 : vector<8x128xf32>
    %114 = arith.divf %112, %113 : vector<8x128xf32>
    %115 = vector.extract_strided_slice %108 {offsets = [0, 128], sizes = [8, 128], strides = [1, 1]} : vector<8x512xf32> to vector<8x128xf32>
    %116 = arith.negf %115 : vector<8x128xf32>
    %117 = math.exp %116 : vector<8x128xf32>
    %cst_32 = arith.constant 1.000000e+00 : f32
    %118 = vector.broadcast %cst_32 : f32 to vector<8x128xf32>
    %119 = arith.addf %118, %117 : vector<8x128xf32>
    %120 = arith.divf %118, %119 : vector<8x128xf32>
    %121 = vector.extract_strided_slice %108 {offsets = [0, 256], sizes = [8, 128], strides = [1, 1]} : vector<8x512xf32> to vector<8x128xf32>
    %122 = math.tanh %121 : vector<8x128xf32>
    %123 = vector.extract_strided_slice %108 {offsets = [0, 384], sizes = [8, 128], strides = [1, 1]} : vector<8x512xf32> to vector<8x128xf32>
    %124 = arith.negf %123 : vector<8x128xf32>
    %125 = math.exp %124 : vector<8x128xf32>
    %cst_33 = arith.constant 1.000000e+00 : f32
    %126 = vector.broadcast %cst_33 : f32 to vector<8x128xf32>
    %127 = arith.addf %126, %125 : vector<8x128xf32>
    %128 = arith.divf %126, %127 : vector<8x128xf32>
    %129 = arith.mulf %120, %100 : vector<8x128xf32>
    %130 = arith.mulf %114, %122 : vector<8x128xf32>
    %131 = arith.addf %129, %130 : vector<8x128xf32>
    %132 = math.tanh %131 : vector<8x128xf32>
    %133 = arith.mulf %128, %132 : vector<8x128xf32>
    %c4_i32 = arith.constant 4 : i32
    %c8_i32_34 = arith.constant 8 : i32
    %134 = arith.muli %c4_i32, %c8_i32_34 : i32
    %135 = tpu.assume_multiple %134, 8 : i32
    %136 = arith.index_cast %135 : i32 to index
    %c0_35 = arith.constant 0 : index
    %137 = vector.load %arg9[%136, %c0_35] : memref<64x512xf32, #tpu.memory_space<vmem>>, vector<8x512xf32>
    %cst_36 = arith.constant dense<0.000000e+00> : vector<8x512xf32>
    %138 = tpu.matmul %133, %7, %cst_36 {dimension_numbers = #tpu.dot_dimension_numbers<[1], [0], [0], [1], [0, 0, 1, 1], [], []>} : vector<8x128xf32>, vector<128x512xf32>, vector<8x512xf32> -> vector<8x512xf32>
    %139 = arith.addf %137, %138 : vector<8x512xf32>
    %140 = vector.extract_strided_slice %139 {offsets = [0, 0], sizes = [8, 128], strides = [1, 1]} : vector<8x512xf32> to vector<8x128xf32>
    %141 = arith.negf %140 : vector<8x128xf32>
    %142 = math.exp %141 : vector<8x128xf32>
    %cst_37 = arith.constant 1.000000e+00 : f32
    %143 = vector.broadcast %cst_37 : f32 to vector<8x128xf32>
    %144 = arith.addf %143, %142 : vector<8x128xf32>
    %145 = arith.divf %143, %144 : vector<8x128xf32>
    %146 = vector.extract_strided_slice %139 {offsets = [0, 128], sizes = [8, 128], strides = [1, 1]} : vector<8x512xf32> to vector<8x128xf32>
    %147 = arith.negf %146 : vector<8x128xf32>
    %148 = math.exp %147 : vector<8x128xf32>
    %cst_38 = arith.constant 1.000000e+00 : f32
    %149 = vector.broadcast %cst_38 : f32 to vector<8x128xf32>
    %150 = arith.addf %149, %148 : vector<8x128xf32>
    %151 = arith.divf %149, %150 : vector<8x128xf32>
    %152 = vector.extract_strided_slice %139 {offsets = [0, 256], sizes = [8, 128], strides = [1, 1]} : vector<8x512xf32> to vector<8x128xf32>
    %153 = math.tanh %152 : vector<8x128xf32>
    %154 = vector.extract_strided_slice %139 {offsets = [0, 384], sizes = [8, 128], strides = [1, 1]} : vector<8x512xf32> to vector<8x128xf32>
    %155 = arith.negf %154 : vector<8x128xf32>
    %156 = math.exp %155 : vector<8x128xf32>
    %cst_39 = arith.constant 1.000000e+00 : f32
    %157 = vector.broadcast %cst_39 : f32 to vector<8x128xf32>
    %158 = arith.addf %157, %156 : vector<8x128xf32>
    %159 = arith.divf %157, %158 : vector<8x128xf32>
    %160 = arith.mulf %151, %131 : vector<8x128xf32>
    %161 = arith.mulf %145, %153 : vector<8x128xf32>
    %162 = arith.addf %160, %161 : vector<8x128xf32>
    %163 = math.tanh %162 : vector<8x128xf32>
    %164 = arith.mulf %159, %163 : vector<8x128xf32>
    %c5_i32 = arith.constant 5 : i32
    %c8_i32_40 = arith.constant 8 : i32
    %165 = arith.muli %c5_i32, %c8_i32_40 : i32
    %166 = tpu.assume_multiple %165, 8 : i32
    %167 = arith.index_cast %166 : i32 to index
    %c0_41 = arith.constant 0 : index
    %168 = vector.load %arg9[%167, %c0_41] : memref<64x512xf32, #tpu.memory_space<vmem>>, vector<8x512xf32>
    %cst_42 = arith.constant dense<0.000000e+00> : vector<8x512xf32>
    %169 = tpu.matmul %164, %7, %cst_42 {dimension_numbers = #tpu.dot_dimension_numbers<[1], [0], [0], [1], [0, 0, 1, 1], [], []>} : vector<8x128xf32>, vector<128x512xf32>, vector<8x512xf32> -> vector<8x512xf32>
    %170 = arith.addf %168, %169 : vector<8x512xf32>
    %171 = vector.extract_strided_slice %170 {offsets = [0, 0], sizes = [8, 128], strides = [1, 1]} : vector<8x512xf32> to vector<8x128xf32>
    %172 = arith.negf %171 : vector<8x128xf32>
    %173 = math.exp %172 : vector<8x128xf32>
    %cst_43 = arith.constant 1.000000e+00 : f32
    %174 = vector.broadcast %cst_43 : f32 to vector<8x128xf32>
    %175 = arith.addf %174, %173 : vector<8x128xf32>
    %176 = arith.divf %174, %175 : vector<8x128xf32>
    %177 = vector.extract_strided_slice %170 {offsets = [0, 128], sizes = [8, 128], strides = [1, 1]} : vector<8x512xf32> to vector<8x128xf32>
    %178 = arith.negf %177 : vector<8x128xf32>
    %179 = math.exp %178 : vector<8x128xf32>
    %cst_44 = arith.constant 1.000000e+00 : f32
    %180 = vector.broadcast %cst_44 : f32 to vector<8x128xf32>
    %181 = arith.addf %180, %179 : vector<8x128xf32>
    %182 = arith.divf %180, %181 : vector<8x128xf32>
    %183 = vector.extract_strided_slice %170 {offsets = [0, 256], sizes = [8, 128], strides = [1, 1]} : vector<8x512xf32> to vector<8x128xf32>
    %184 = math.tanh %183 : vector<8x128xf32>
    %185 = vector.extract_strided_slice %170 {offsets = [0, 384], sizes = [8, 128], strides = [1, 1]} : vector<8x512xf32> to vector<8x128xf32>
    %186 = arith.negf %185 : vector<8x128xf32>
    %187 = math.exp %186 : vector<8x128xf32>
    %cst_45 = arith.constant 1.000000e+00 : f32
    %188 = vector.broadcast %cst_45 : f32 to vector<8x128xf32>
    %189 = arith.addf %188, %187 : vector<8x128xf32>
    %190 = arith.divf %188, %189 : vector<8x128xf32>
    %191 = arith.mulf %182, %162 : vector<8x128xf32>
    %192 = arith.mulf %176, %184 : vector<8x128xf32>
    %193 = arith.addf %191, %192 : vector<8x128xf32>
    %194 = math.tanh %193 : vector<8x128xf32>
    %195 = arith.mulf %190, %194 : vector<8x128xf32>
    %c6_i32 = arith.constant 6 : i32
    %c8_i32_46 = arith.constant 8 : i32
    %196 = arith.muli %c6_i32, %c8_i32_46 : i32
    %197 = tpu.assume_multiple %196, 8 : i32
    %198 = arith.index_cast %197 : i32 to index
    %c0_47 = arith.constant 0 : index
    %199 = vector.load %arg9[%198, %c0_47] : memref<64x512xf32, #tpu.memory_space<vmem>>, vector<8x512xf32>
    %cst_48 = arith.constant dense<0.000000e+00> : vector<8x512xf32>
    %200 = tpu.matmul %195, %7, %cst_48 {dimension_numbers = #tpu.dot_dimension_numbers<[1], [0], [0], [1], [0, 0, 1, 1], [], []>} : vector<8x128xf32>, vector<128x512xf32>, vector<8x512xf32> -> vector<8x512xf32>
    %201 = arith.addf %199, %200 : vector<8x512xf32>
    %202 = vector.extract_strided_slice %201 {offsets = [0, 0], sizes = [8, 128], strides = [1, 1]} : vector<8x512xf32> to vector<8x128xf32>
    %203 = arith.negf %202 : vector<8x128xf32>
    %204 = math.exp %203 : vector<8x128xf32>
    %cst_49 = arith.constant 1.000000e+00 : f32
    %205 = vector.broadcast %cst_49 : f32 to vector<8x128xf32>
    %206 = arith.addf %205, %204 : vector<8x128xf32>
    %207 = arith.divf %205, %206 : vector<8x128xf32>
    %208 = vector.extract_strided_slice %201 {offsets = [0, 128], sizes = [8, 128], strides = [1, 1]} : vector<8x512xf32> to vector<8x128xf32>
    %209 = arith.negf %208 : vector<8x128xf32>
    %210 = math.exp %209 : vector<8x128xf32>
    %cst_50 = arith.constant 1.000000e+00 : f32
    %211 = vector.broadcast %cst_50 : f32 to vector<8x128xf32>
    %212 = arith.addf %211, %210 : vector<8x128xf32>
    %213 = arith.divf %211, %212 : vector<8x128xf32>
    %214 = vector.extract_strided_slice %201 {offsets = [0, 256], sizes = [8, 128], strides = [1, 1]} : vector<8x512xf32> to vector<8x128xf32>
    %215 = math.tanh %214 : vector<8x128xf32>
    %216 = vector.extract_strided_slice %201 {offsets = [0, 384], sizes = [8, 128], strides = [1, 1]} : vector<8x512xf32> to vector<8x128xf32>
    %217 = arith.negf %216 : vector<8x128xf32>
    %218 = math.exp %217 : vector<8x128xf32>
    %cst_51 = arith.constant 1.000000e+00 : f32
    %219 = vector.broadcast %cst_51 : f32 to vector<8x128xf32>
    %220 = arith.addf %219, %218 : vector<8x128xf32>
    %221 = arith.divf %219, %220 : vector<8x128xf32>
    %222 = arith.mulf %213, %193 : vector<8x128xf32>
    %223 = arith.mulf %207, %215 : vector<8x128xf32>
    %224 = arith.addf %222, %223 : vector<8x128xf32>
    %225 = math.tanh %224 : vector<8x128xf32>
    %226 = arith.mulf %221, %225 : vector<8x128xf32>
    %c7_i32 = arith.constant 7 : i32
    %c8_i32_52 = arith.constant 8 : i32
    %227 = arith.muli %c7_i32, %c8_i32_52 : i32
    %228 = tpu.assume_multiple %227, 8 : i32
    %229 = arith.index_cast %228 : i32 to index
    %c0_53 = arith.constant 0 : index
    %230 = vector.load %arg9[%229, %c0_53] : memref<64x512xf32, #tpu.memory_space<vmem>>, vector<8x512xf32>
    %cst_54 = arith.constant dense<0.000000e+00> : vector<8x512xf32>
    %231 = tpu.matmul %226, %7, %cst_54 {dimension_numbers = #tpu.dot_dimension_numbers<[1], [0], [0], [1], [0, 0, 1, 1], [], []>} : vector<8x128xf32>, vector<128x512xf32>, vector<8x512xf32> -> vector<8x512xf32>
    %232 = arith.addf %230, %231 : vector<8x512xf32>
    %233 = vector.extract_strided_slice %232 {offsets = [0, 0], sizes = [8, 128], strides = [1, 1]} : vector<8x512xf32> to vector<8x128xf32>
    %234 = arith.negf %233 : vector<8x128xf32>
    %235 = math.exp %234 : vector<8x128xf32>
    %cst_55 = arith.constant 1.000000e+00 : f32
    %236 = vector.broadcast %cst_55 : f32 to vector<8x128xf32>
    %237 = arith.addf %236, %235 : vector<8x128xf32>
    %238 = arith.divf %236, %237 : vector<8x128xf32>
    %239 = vector.extract_strided_slice %232 {offsets = [0, 128], sizes = [8, 128], strides = [1, 1]} : vector<8x512xf32> to vector<8x128xf32>
    %240 = arith.negf %239 : vector<8x128xf32>
    %241 = math.exp %240 : vector<8x128xf32>
    %cst_56 = arith.constant 1.000000e+00 : f32
    %242 = vector.broadcast %cst_56 : f32 to vector<8x128xf32>
    %243 = arith.addf %242, %241 : vector<8x128xf32>
    %244 = arith.divf %242, %243 : vector<8x128xf32>
    %245 = vector.extract_strided_slice %232 {offsets = [0, 256], sizes = [8, 128], strides = [1, 1]} : vector<8x512xf32> to vector<8x128xf32>
    %246 = math.tanh %245 : vector<8x128xf32>
    %247 = vector.extract_strided_slice %232 {offsets = [0, 384], sizes = [8, 128], strides = [1, 1]} : vector<8x512xf32> to vector<8x128xf32>
    %248 = arith.negf %247 : vector<8x128xf32>
    %249 = math.exp %248 : vector<8x128xf32>
    %cst_57 = arith.constant 1.000000e+00 : f32
    %250 = vector.broadcast %cst_57 : f32 to vector<8x128xf32>
    %251 = arith.addf %250, %249 : vector<8x128xf32>
    %252 = arith.divf %250, %251 : vector<8x128xf32>
    %253 = arith.mulf %244, %224 : vector<8x128xf32>
    %254 = arith.mulf %238, %246 : vector<8x128xf32>
    %255 = arith.addf %253, %254 : vector<8x128xf32>
    %256 = math.tanh %255 : vector<8x128xf32>
    %257 = arith.mulf %252, %256 : vector<8x128xf32>
    %c8_i32_58 = arith.constant 8 : i32
    %c0_59 = arith.constant 0 : index
    %c0_60 = arith.constant 0 : index
    %258 = vector.load %arg5[%c0_59, %c0_60] : memref<128x128xf32, #tpu.memory_space<vmem>>, vector<128x128xf32>
    %cst_61 = arith.constant dense<0.000000e+00> : vector<8x128xf32>
    %259 = tpu.matmul %257, %258, %cst_61 {dimension_numbers = #tpu.dot_dimension_numbers<[1], [0], [0], [1], [0, 0, 1, 1], [], []>} : vector<8x128xf32>, vector<128x128xf32>, vector<8x128xf32> -> vector<8x128xf32>
    %c0_62 = arith.constant 0 : index
    %c0_63 = arith.constant 0 : index
    %260 = vector.load %arg1[%c0_62, %c0_63] : memref<8x128xf32, #tpu.memory_space<vmem>>, vector<8x128xf32>
    %c0_64 = arith.constant 0 : index
    %c0_65 = arith.constant 0 : index
    %261 = vector.load %arg6[%c0_64, %c0_65] : memref<128x128xf32, #tpu.memory_space<vmem>>, vector<128x128xf32>
    %cst_66 = arith.constant dense<0.000000e+00> : vector<8x128xf32>
    %262 = tpu.matmul %260, %261, %cst_66 {dimension_numbers = #tpu.dot_dimension_numbers<[1], [0], [0], [1], [0, 0, 1, 1], [], []>} : vector<8x128xf32>, vector<128x128xf32>, vector<8x128xf32> -> vector<8x128xf32>
    %263 = arith.addf %259, %262 : vector<8x128xf32>
    %c0_67 = arith.constant 0 : index
    %c0_68 = arith.constant 0 : index
    %264 = vector.load %arg7[%c0_67, %c0_68] : memref<1x128xf32, #tpu.memory_space<vmem>>, vector<1x128xf32>
    %265 = vector.broadcast %264 : vector<1x128xf32> to vector<8x128xf32>
    %266 = arith.addf %263, %265 : vector<8x128xf32>
    %c0_69 = arith.constant 0 : index
    %c0_70 = arith.constant 0 : index
    %267 = vector.load %arg8[%c0_69, %c0_70] : memref<8x128xf32, #tpu.memory_space<vmem>>, vector<8x128xf32>
    tpu.vector_store %arg8[%c0_69, %c0_70], %266 {strides = array<i32>} : memref<8x128xf32, #tpu.memory_space<vmem>>, vector<8x128xf32>,
    return
  }
}

</mosaic_0001>

<llo_original>
// kernel: instruction_following_forward.1
$region0: #{instruction_following_forward.1}
  #allocation0 [shape = 'u32[]', space=smem, size = 0x4, offset = 0x4, fixed_abs, tag = 'smem constant byte address 0x4 - core index']
  #allocation1 [shape = 'u32[144,128]{1,0:T(1,128)}', space=vmem, size = 0x12000, scoped, tag = 'internal scratch']
  #allocation2 [shape = 'f32[64,512]{1,0:T(8,128)}', space=vmem, size = 0x20000, scoped, tag = 'scratch operand']
  %s0 = inlined_call_operand.vmem [shape: f32[64,128], index: 0, kind: input, shape index: {}]
  %s1 = inlined_call_operand.vmem [shape: f32[8,128], index: 1, kind: input, shape index: {}]
  %s2 = inlined_call_operand.hbm [shape: f32[128,512], index: 2, kind: input, shape index: {}]
  %s3 = inlined_call_operand.hbm [shape: f32[128,512], index: 3, kind: input, shape index: {}]
  %s4 = inlined_call_operand.vmem [shape: f32[1,512], index: 4, kind: input, shape index: {}]
  %s5 = inlined_call_operand.vmem [shape: f32[128,128], index: 5, kind: input, shape index: {}]
  %s6 = inlined_call_operand.vmem [shape: f32[128,128], index: 6, kind: input, shape index: {}]
  %s7 = inlined_call_operand.vmem [shape: f32[1,128], index: 7, kind: input, shape index: {}]
  %s8 = inlined_call_operand.vmem [shape: f32[8,128], index: 8, kind: output, shape index: {}]
  %s9 = sld [smem:[#allocation0]]
  $region50: #{instruction_following_forward.1} parent=0
    _
  %s11 = ssub.s32 1, %s9
  %s12 = scalar_select 0, %s11, %s9
  $region1: #{instruction_following_forward.1} parent=0
    #allocation3 [shape = 'u8[262144]{0}', space=vmem, size = 0x40000, scoped, tag = 'input window, operand 2, single buffered']
    #allocation4 [shape = 's32[1]{0}', space=sflag, size = 0x4, scoped, tag = 'scoped memory for instruction_following_forward.1']
    #allocation5 [shape = 'u8[262144]{0}', space=vmem, size = 0x40000, scoped, tag = 'input window, operand 3, single buffered']
    #allocation6 [shape = 's32[1]{0}', space=sflag, size = 0x4, scoped, tag = 'scoped memory for instruction_following_forward.1']
    %13 = vsyncpa [#allocation4], 0
    %14 = vsyncpa [#allocation6], 0
    // Predicated region
    $region2: #{instruction_following_forward.1} parent=1 // pred_check
      _
    $region3: #{instruction_following_forward.1} parent=1 // pred_check_branch
      %16 = sbr.rel (0) target = $region5
    $region4: #{instruction_following_forward.1} parent=1 // pred_region
      _
    $region5: #{instruction_following_forward.1} parent=1 // pred_fallthru
      _
    // Predicated region
    $region6: #{instruction_following_forward.1} parent=1 // pred_check
      _
    $region7: #{instruction_following_forward.1} parent=1 // pred_check_branch
      %18 = sbr.rel (0) target = $region9
    $region8: #{instruction_following_forward.1} parent=1 // pred_region
      _
    $region9: #{instruction_following_forward.1} parent=1 // pred_fallthru
      _
    // Predicated region
    $region10: #{instruction_following_forward.1} parent=1 // pred_check
      _
    $region11: #{instruction_following_forward.1} parent=1 // pred_check_branch
      %20 = sbr.rel (0) target = $region13
    $region12: #{instruction_following_forward.1} parent=1 // pred_region
      %s22 = ssub.s32 8192, 8192
      %23 = vsyncadd [#allocation4], %s22
      %s24 = sshll.u32 [#allocation3], 4
      %s25 = int_to_ptr.vmem [resolvable:$true] %s24
      %30 = dma.hbm_to_vmem [thread:$0]  %s2, 8192, %s25, [#allocation4], 512, 512, 32
    $region13: #{instruction_following_forward.1} parent=1 // pred_fallthru
      _
    // Predicated region
    $region14: #{instruction_following_forward.1} parent=1 // pred_check
      _
    $region15: #{instruction_following_forward.1} parent=1 // pred_check_branch
      %32 = sbr.rel (0) target = $region17
    $region16: #{instruction_following_forward.1} parent=1 // pred_region
      %s34 = ssub.s32 8192, 8192
      %35 = vsyncadd [#allocation6], %s34
      %s36 = sshll.u32 [#allocation5], 4
      %s37 = int_to_ptr.vmem [resolvable:$true] %s36
      %42 = dma.hbm_to_vmem [thread:$0]  %s3, 8192, %s37, [#allocation6], 512, 512, 32
    $region17: #{instruction_following_forward.1} parent=1 // pred_fallthru
      _
    // Predicated region
    $region18: #{instruction_following_forward.1} parent=1 // pred_check
      _
    $region19: #{instruction_following_forward.1} parent=1 // pred_check_branch
      %44 = sbr.rel (0) target = $region21
    $region20: #{instruction_following_forward.1} parent=1 // pred_region
      _
    $region21: #{instruction_following_forward.1} parent=1 // pred_fallthru
      _
    // Predicated region
    $region22: #{instruction_following_forward.1} parent=1 // pred_check
      _
    $region23: #{instruction_following_forward.1} parent=1 // pred_check_branch
      %46 = sbr.rel (0) target = $region25
    $region24: #{instruction_following_forward.1} parent=1 // pred_region
      _
    $region25: #{instruction_following_forward.1} parent=1 // pred_fallthru
      _
    // Predicated region
    $region26: #{instruction_following_forward.1} parent=1 // pred_check
      _
    $region27: #{instruction_following_forward.1} parent=1 // pred_check_branch
      %48 = sbr.rel (0) target = $region29
    $region28: #{instruction_following_forward.1} parent=1 // pred_region
      _
    $region29: #{instruction_following_forward.1} parent=1 // pred_fallthru
      _
    // Predicated region
    $region30: #{instruction_following_forward.1} parent=1 // pred_check
      _
    $region31: #{instruction_following_forward.1} parent=1 // pred_check_branch
      %50 = sbr.rel (0) target = $region33
    $region32: #{instruction_following_forward.1} parent=1 // pred_region
      _
    $region33: #{instruction_following_forward.1} parent=1 // pred_fallthru
      _
    // Predicated region
    $region34: #{instruction_following_forward.1} parent=1 // pred_check
      _
    $region35: #{instruction_following_forward.1} parent=1 // pred_check_branch
      %52 = sbr.rel (0) target = $region37
    $region36: #{instruction_following_forward.1} parent=1 // pred_region
      %53 = dma.done [#allocation4], 8192
    $region37: #{instruction_following_forward.1} parent=1 // pred_fallthru
      _
    // Predicated region
    $region38: #{instruction_following_forward.1} parent=1 // pred_check
      _
    $region39: #{instruction_following_forward.1} parent=1 // pred_check_branch
      %55 = sbr.rel (0) target = $region41
    $region40: #{instruction_following_forward.1} parent=1 // pred_region
      %56 = dma.done [#allocation6], 8192
    $region41: #{instruction_following_forward.1} parent=1 // pred_fallthru
      _
    %v57 = vld [vmem:[%s0] sm:$0xff]
    %v58 = vld [vmem:[%s0 + $0x8] sm:$0xff]
    %v59 = vld [vmem:[%s0 + $0x10] sm:$0xff]
    %v60 = vld [vmem:[%s0 + $0x18] sm:$0xff]
    %v61 = vld [vmem:[%s0 + $0x20] sm:$0xff]
    %v62 = vld [vmem:[%s0 + $0x28] sm:$0xff]
    %v63 = vld [vmem:[%s0 + $0x30] sm:$0xff]
    %v64 = vld [vmem:[%s0 + $0x38] sm:$0xff]
    %v65 = vld [vmem:[#allocation3] sm:$0xff]
    %v66 = vld [vmem:[#allocation3 + $0x8] sm:$0xff]
    %v67 = vld [vmem:[#allocation3 + $0x10] sm:$0xff]
    %v68 = vld [vmem:[#allocation3 + $0x18] sm:$0xff]
    %v69 = vld [vmem:[#allocation3 + $0x20] sm:$0xff]
    %v70 = vld [vmem:[#allocation3 + $0x28] sm:$0xff]
    %v71 = vld [vmem:[#allocation3 + $0x30] sm:$0xff]
    %v72 = vld [vmem:[#allocation3 + $0x38] sm:$0xff]
    %v73 = vld [vmem:[#allocation3 + $0x40] sm:$0xff]
    %v74 = vld [vmem:[#allocation3 + $0x48] sm:$0xff]
    %v75 = vld [vmem:[#allocation3 + $0x50] sm:$0xff]
    %v76 = vld [vmem:[#allocation3 + $0x58] sm:$0xff]
    %v77 = vld [vmem:[#allocation3 + $0x60] sm:$0xff]
    %v78 = vld [vmem:[#allocation3 + $0x68] sm:$0xff]
    %v79 = vld [vmem:[#allocation3 + $0x70] sm:$0xff]
    %v80 = vld [vmem:[#allocation3 + $0x78] sm:$0xff]
    %v81 = vld [vmem:[#allocation3 + $0x80] sm:$0xff]
    %v82 = vld [vmem:[#allocation3 + $0x88] sm:$0xff]
    %v83 = vld [vmem:[#allocation3 + $0x90] sm:$0xff]
    %v84 = vld [vmem:[#allocation3 + $0x98] sm:$0xff]
    %v85 = vld [vmem:[#allocation3 + $0xa0] sm:$0xff]
    %v86 = vld [vmem:[#allocation3 + $0xa8] sm:$0xff]
    %v87 = vld [vmem:[#allocation3 + $0xb0] sm:$0xff]
    %v88 = vld [vmem:[#allocation3 + $0xb8] sm:$0xff]
    %v89 = vld [vmem:[#allocation3 + $0xc0] sm:$0xff]
    %v90 = vld [vmem:[#allocation3 + $0xc8] sm:$0xff]
    %v91 = vld [vmem:[#allocation3 + $0xd0] sm:$0xff]
    %v92 = vld [vmem:[#allocation3 + $0xd8] sm:$0xff]
    %v93 = vld [vmem:[#allocation3 + $0xe0] sm:$0xff]
    %v94 = vld [vmem:[#allocation3 + $0xe8] sm:$0xff]
    %v95 = vld [vmem:[#allocation3 + $0xf0] sm:$0xff]
    %v96 = vld [vmem:[#allocation3 + $0xf8] sm:$0xff]
    %v97 = vld [vmem:[#allocation3 + $0x100] sm:$0xff]
    %v98 = vld [vmem:[#allocation3 + $0x108] sm:$0xff]
    %v99 = vld [vmem:[#allocation3 + $0x110] sm:$0xff]
    %v100 = vld [vmem:[#allocation3 + $0x118] sm:$0xff]
    %v101 = vld [vmem:[#allocation3 + $0x120] sm:$0xff]
    %v102 = vld [vmem:[#allocation3 + $0x128] sm:$0xff]
    %v103 = vld [vmem:[#allocation3 + $0x130] sm:$0xff]
    %v104 = vld [vmem:[#allocation3 + $0x138] sm:$0xff]
    %v105 = vld [vmem:[#allocation3 + $0x140] sm:$0xff]
    %v106 = vld [vmem:[#allocation3 + $0x148] sm:$0xff]
    %v107 = vld [vmem:[#allocation3 + $0x150] sm:$0xff]
    %v108 = vld [vmem:[#allocation3 + $0x158] sm:$0xff]
    %v109 = vld [vmem:[#allocation3 + $0x160] sm:$0xff]
    %v110 = vld [vmem:[#allocation3 + $0x168] sm:$0xff]
    %v111 = vld [vmem:[#allocation3 + $0x170] sm:$0xff]
    %v112 = vld [vmem:[#allocation3 + $0x178] sm:$0xff]
    %v113 = vld [vmem:[#allocation3 + $0x180] sm:$0xff]
    %v114 = vld [vmem:[#allocation3 + $0x188] sm:$0xff]
    %v115 = vld [vmem:[#allocation3 + $0x190] sm:$0xff]
    %v116 = vld [vmem:[#allocation3 + $0x198] sm:$0xff]
    %v117 = vld [vmem:[#allocation3 + $0x1a0] sm:$0xff]
    %v118 = vld [vmem:[#allocation3 + $0x1a8] sm:$0xff]
    %v119 = vld [vmem:[#allocation3 + $0x1b0] sm:$0xff]
    %v120 = vld [vmem:[#allocation3 + $0x1b8] sm:$0xff]
    %v121 = vld [vmem:[#allocation3 + $0x1c0] sm:$0xff]
    %v122 = vld [vmem:[#allocation3 + $0x1c8] sm:$0xff]
    %v123 = vld [vmem:[#allocation3 + $0x1d0] sm:$0xff]
    %v124 = vld [vmem:[#allocation3 + $0x1d8] sm:$0xff]
    %v125 = vld [vmem:[#allocation3 + $0x1e0] sm:$0xff]
    %v126 = vld [vmem:[#allocation3 + $0x1e8] sm:$0xff]
    %v127 = vld [vmem:[#allocation3 + $0x1f0] sm:$0xff]
    %v128 = vld [vmem:[#allocation3 + $0x1f8] sm:$0xff]
    %v129 = vld [vmem:[%s4] sm:$0xf]
    %v131 = vlaneseq
    %v132 = vshrl.u32 %v131, 7
    %v133 = vsub.s32 0, %v132
    %v134 = vrot.slane %v129, %v133
    %v135 = vlaneseq
    %v136 = vshrl.u32 %v135, 7
    %v137 = vsub.s32 1, %v136
    %v138 = vrot.slane %v129, %v137
    %v139 = vlaneseq
    %v140 = vshrl.u32 %v139, 7
    %v141 = vsub.s32 2, %v140
    %v142 = vrot.slane %v129, %v141
    %v143 = vlaneseq
    %v144 = vshrl.u32 %v143, 7
    %v145 = vsub.s32 3, %v144
    %v146 = vrot.slane %v129, %v145
    %151 = vmatprep.subr.mxu0 %v66
    %152 = vmatpush1.msra.mxu0 %v65
    %153 = vmatprep.subr.mxu0 %v70
    %154 = vmatpush1.msra.mxu0 %v69
    %155 = vmatprep.subr.mxu0 %v74
    %156 = vmatpush1.msra.mxu0 %v73
    %157 = vmatprep.subr.mxu0 %v78
    %158 = vmatpush1.msra.mxu0 %v77
    %159 = vmatprep.subr.mxu0 %v82
    %160 = vmatpush1.msra.mxu0 %v81
    %161 = vmatprep.subr.mxu0 %v86
    %162 = vmatpush1.msra.mxu0 %v85
    %163 = vmatprep.subr.mxu0 %v90
    %164 = vmatpush1.msra.mxu0 %v89
    %165 = vmatprep.subr.mxu0 %v94
    %166 = vmatpush1.msra.mxu0 %v93
    %167 = vmatprep.subr.mxu0 %v98
    %168 = vmatpush1.msra.mxu0 %v97
    %169 = vmatprep.subr.mxu0 %v102
    %170 = vmatpush1.msra.mxu0 %v101
    %171 = vmatprep.subr.mxu0 %v106
    %172 = vmatpush1.msra.mxu0 %v105
    %173 = vmatprep.subr.mxu0 %v110
    %174 = vmatpush1.msra.mxu0 %v109
    %175 = vmatprep.subr.mxu0 %v114
    %176 = vmatpush1.msra.mxu0 %v113
    %177 = vmatprep.subr.mxu0 %v118
    %178 = vmatpush1.msra.mxu0 %v117
    %179 = vmatprep.subr.mxu0 %v122
    %180 = vmatpush1.msra.mxu0 %v121
    %181 = vmatprep.subr.mxu0 %v126
    %182 = vmatpush1.msra.mxu0 %v125
    %183 = vmatprep.subr.mxu0 0.0
    %184 = vmatpush1.msra.mxu0 0.0
    %185 = vmatprep.subr.mxu0 0.0
    %186 = vmatpush1.msra.mxu0 0.0
    %187 = vmatprep.subr.mxu0 0.0
    %188 = vmatpush1.msra.mxu0 0.0
    %189 = vmatprep.subr.mxu0 0.0
    %190 = vmatpush1.msra.mxu0 0.0
    %191 = vmatprep.subr.mxu0 0.0
    %192 = vmatpush1.msra.mxu0 0.0
    %193 = vmatprep.subr.mxu0 0.0
    %194 = vmatpush1.msra.mxu0 0.0
    %195 = vmatprep.subr.mxu0 0.0
    %196 = vmatpush1.msra.mxu0 0.0
    %197 = vmatprep.subr.mxu0 0.0
    %198 = vmatpush1.msra.mxu0 0.0
    %199 = vmatprep.subr.mxu0 0.0
    %200 = vmatpush1.msra.mxu0 0.0
    %201 = vmatprep.subr.mxu0 0.0
    %202 = vmatpush1.msra.mxu0 0.0
    %203 = vmatprep.subr.mxu0 0.0
    %204 = vmatpush1.msra.mxu0 0.0
    %205 = vmatprep.subr.mxu0 0.0
    %206 = vmatpush1.msra.mxu0 0.0
    %207 = vmatprep.subr.mxu0 0.0
    %208 = vmatpush1.msra.mxu0 0.0
    %209 = vmatprep.subr.mxu0 0.0
    %210 = vmatpush1.msra.mxu0 0.0
    %211 = vmatprep.subr.mxu0 0.0
    %212 = vmatpush1.msra.mxu0 0.0
    %213 = vmatprep.subr.mxu0 0.0
    %214 = vmatpush1.msra.mxu0 0.0
    %215 = vmatprep.mubr.f32.mxu0 0.0
    %216 = vmatmul.mubr.f32.gmra.mrb[0].mxu0 %v57
    %v217 = vpop.f32.mrb[0].mxu0
    %v218 = vadd.f32 %v134, %v217
    %v219 = vpop.f32.mrb[0].mxu0
    %v220 = vadd.f32 %v138, %v219
    %221 = vmatprep.mubr.f32.mxu0 0.0
    %222 = vmatmul.mubr.f32.gmra.mrb[0].mxu0 %v58
    %v223 = vpop.f32.mrb[0].mxu0
    %v224 = vadd.f32 %v134, %v223
    %v225 = vpop.f32.mrb[0].mxu0
    %v226 = vadd.f32 %v138, %v225
    %227 = vmatprep.mubr.f32.mxu0 0.0
    %228 = vmatmul.mubr.f32.gmra.mrb[0].mxu0 %v59
    %v229 = vpop.f32.mrb[0].mxu0
    %v230 = vadd.f32 %v134, %v229
    %v231 = vpop.f32.mrb[0].mxu0
    %v232 = vadd.f32 %v138, %v231
    %233 = vmatprep.mubr.f32.mxu0 0.0
    %234 = vmatmul.mubr.f32.gmra.mrb[0].mxu0 %v60
    %v235 = vpop.f32.mrb[0].mxu0
    %v236 = vadd.f32 %v134, %v235
    %v237 = vpop.f32.mrb[0].mxu0
    %v238 = vadd.f32 %v138, %v237
    %239 = vmatprep.mubr.f32.mxu0 0.0
    %240 = vmatmul.mubr.f32.gmra.mrb[0].mxu0 %v61
    %v241 = vpop.f32.mrb[0].mxu0
    %v242 = vadd.f32 %v134, %v241
    %v243 = vpop.f32.mrb[0].mxu0
    %v244 = vadd.f32 %v138, %v243
    %245 = vmatprep.mubr.f32.mxu0 0.0
    %246 = vmatmul.mubr.f32.gmra.mrb[0].mxu0 %v62
    %v247 = vpop.f32.mrb[0].mxu0
    %v248 = vadd.f32 %v134, %v247
    %v249 = vpop.f32.mrb[0].mxu0
    %v250 = vadd.f32 %v138, %v249
    %251 = vmatprep.mubr.f32.mxu0 0.0
    %252 = vmatmul.mubr.f32.gmra.mrb[0].mxu0 %v63
    %v253 = vpop.f32.mrb[0].mxu0
    %v254 = vadd.f32 %v134, %v253
    %v255 = vpop.f32.mrb[0].mxu0
    %v256 = vadd.f32 %v138, %v255
    %257 = vmatprep.mubr.f32.mxu0 0.0
    %258 = vmatmul.mubr.f32.gmra.mrb[0].mxu0 %v64
    %v259 = vpop.f32.mrb[0].mxu0
    %v260 = vadd.f32 %v134, %v259
    %v261 = vpop.f32.mrb[0].mxu0
    %v262 = vadd.f32 %v138, %v261
    %263 = vdwg.mxu0
    %264 = vmatprep.subr.mxu0 %v68
    %265 = vmatpush1.msra.mxu0 %v67
    %266 = vmatprep.subr.mxu0 %v72
    %267 = vmatpush1.msra.mxu0 %v71
    %268 = vmatprep.subr.mxu0 %v76
    %269 = vmatpush1.msra.mxu0 %v75
    %270 = vmatprep.subr.mxu0 %v80
    %271 = vmatpush1.msra.mxu0 %v79
    %272 = vmatprep.subr.mxu0 %v84
    %273 = vmatpush1.msra.mxu0 %v83
    %274 = vmatprep.subr.mxu0 %v88
    %275 = vmatpush1.msra.mxu0 %v87
    %276 = vmatprep.subr.mxu0 %v92
    %277 = vmatpush1.msra.mxu0 %v91
    %278 = vmatprep.subr.mxu0 %v96
    %279 = vmatpush1.msra.mxu0 %v95
    %280 = vmatprep.subr.mxu0 %v100
    %281 = vmatpush1.msra.mxu0 %v99
    %282 = vmatprep.subr.mxu0 %v104
    %283 = vmatpush1.msra.mxu0 %v103
    %284 = vmatprep.subr.mxu0 %v108
    %285 = vmatpush1.msra.mxu0 %v107
    %286 = vmatprep.subr.mxu0 %v112
    %287 = vmatpush1.msra.mxu0 %v111
    %288 = vmatprep.subr.mxu0 %v116
    %289 = vmatpush1.msra.mxu0 %v115
    %290 = vmatprep.subr.mxu0 %v120
    %291 = vmatpush1.msra.mxu0 %v119
    %292 = vmatprep.subr.mxu0 %v124
    %293 = vmatpush1.msra.mxu0 %v123
    %294 = vmatprep.subr.mxu0 %v128
    %295 = vmatpush1.msra.mxu0 %v127
    %296 = vmatprep.subr.mxu0 0.0
    %297 = vmatpush1.msra.mxu0 0.0
    %298 = vmatprep.subr.mxu0 0.0
    %299 = vmatpush1.msra.mxu0 0.0
    %300 = vmatprep.subr.mxu0 0.0
    %301 = vmatpush1.msra.mxu0 0.0
    %302 = vmatprep.subr.mxu0 0.0
    %303 = vmatpush1.msra.mxu0 0.0
    %304 = vmatprep.subr.mxu0 0.0
    %305 = vmatpush1.msra.mxu0 0.0
    %306 = vmatprep.subr.mxu0 0.0
    %307 = vmatpush1.msra.mxu0 0.0
    %308 = vmatprep.subr.mxu0 0.0
    %309 = vmatpush1.msra.mxu0 0.0
    %310 = vmatprep.subr.mxu0 0.0
    %311 = vmatpush1.msra.mxu0 0.0
    %312 = vmatprep.subr.mxu0 0.0
    %313 = vmatpush1.msra.mxu0 0.0
    %314 = vmatprep.subr.mxu0 0.0
    %315 = vmatpush1.msra.mxu0 0.0
    %316 = vmatprep.subr.mxu0 0.0
    %317 = vmatpush1.msra.mxu0 0.0
    %318 = vmatprep.subr.mxu0 0.0
    %319 = vmatpush1.msra.mxu0 0.0
    %320 = vmatprep.subr.mxu0 0.0
    %321 = vmatpush1.msra.mxu0 0.0
    %322 = vmatprep.subr.mxu0 0.0
    %323 = vmatpush1.msra.mxu0 0.0
    %324 = vmatprep.subr.mxu0 0.0
    %325 = vmatpush1.msra.mxu0 0.0
    %326 = vmatprep.subr.mxu0 0.0
    %327 = vmatpush1.msra.mxu0 0.0
    %328 = vmatprep.mubr.f32.mxu0 0.0
    %329 = vmatmul.mubr.f32.gmra.mrb[0].mxu0 %v57
    %v330 = vpop.f32.mrb[0].mxu0
    %v331 = vadd.f32 %v142, %v330
    %v332 = vpop.f32.mrb[0].mxu0
    %v333 = vadd.f32 %v146, %v332
    %334 = vmatprep.mubr.f32.mxu0 0.0
    %335 = vmatmul.mubr.f32.gmra.mrb[0].mxu0 %v58
    %v336 = vpop.f32.mrb[0].mxu0
    %v337 = vadd.f32 %v142, %v336
    %v338 = vpop.f32.mrb[0].mxu0
    %v339 = vadd.f32 %v146, %v338
    %340 = vmatprep.mubr.f32.mxu0 0.0
    %341 = vmatmul.mubr.f32.gmra.mrb[0].mxu0 %v59
    %v342 = vpop.f32.mrb[0].mxu0
    %v343 = vadd.f32 %v142, %v342
    %v344 = vpop.f32.mrb[0].mxu0
    %v345 = vadd.f32 %v146, %v344
    %346 = vmatprep.mubr.f32.mxu0 0.0
    %347 = vmatmul.mubr.f32.gmra.mrb[0].mxu0 %v60
    %v348 = vpop.f32.mrb[0].mxu0
    %v349 = vadd.f32 %v142, %v348
    %v350 = vpop.f32.mrb[0].mxu0
    %v351 = vadd.f32 %v146, %v350
    %352 = vmatprep.mubr.f32.mxu0 0.0
    %353 = vmatmul.mubr.f32.gmra.mrb[0].mxu0 %v61
    %v354 = vpop.f32.mrb[0].mxu0
    %v355 = vadd.f32 %v142, %v354
    %v356 = vpop.f32.mrb[0].mxu0
    %v357 = vadd.f32 %v146, %v356
    %358 = vmatprep.mubr.f32.mxu0 0.0
    %359 = vmatmul.mubr.f32.gmra.mrb[0].mxu0 %v62
    %v360 = vpop.f32.mrb[0].mxu0
    %v361 = vadd.f32 %v142, %v360
    %v362 = vpop.f32.mrb[0].mxu0
    %v363 = vadd.f32 %v146, %v362
    %364 = vmatprep.mubr.f32.mxu0 0.0
    %365 = vmatmul.mubr.f32.gmra.mrb[0].mxu0 %v63
    %v366 = vpop.f32.mrb[0].mxu0
    %v367 = vadd.f32 %v142, %v366
    %v368 = vpop.f32.mrb[0].mxu0
    %v369 = vadd.f32 %v146, %v368
    %370 = vmatprep.mubr.f32.mxu0 0.0
    %371 = vmatmul.mubr.f32.gmra.mrb[0].mxu0 %v64
    %v372 = vpop.f32.mrb[0].mxu0
    %v373 = vadd.f32 %v142, %v372
    %v374 = vpop.f32.mrb[0].mxu0
    %v375 = vadd.f32 %v146, %v374
    %376 = vdwg.mxu0
    %377 = vst [vmem:[#allocation2] sm:$0xff] %v218
    %378 = vst [vmem:[#allocation2 + $0x8] sm:$0xff] %v220
    %379 = vst [vmem:[#allocation2 + $0x10] sm:$0xff] %v331
    %380 = vst [vmem:[#allocation2 + $0x18] sm:$0xff] %v333
    %381 = vst [vmem:[#allocation2 + $0x20] sm:$0xff] %v224
    %382 = vst [vmem:[#allocation2 + $0x28] sm:$0xff] %v226
    %383 = vst [vmem:[#allocation2 + $0x30] sm:$0xff] %v337
    %384 = vst [vmem:[#allocation2 + $0x38] sm:$0xff] %v339
    %385 = vst [vmem:[#allocation2 + $0x40] sm:$0xff] %v230
    %386 = vst [vmem:[#allocation2 + $0x48] sm:$0xff] %v232
    %387 = vst [vmem:[#allocation2 + $0x50] sm:$0xff] %v343
    %388 = vst [vmem:[#allocation2 + $0x58] sm:$0xff] %v345
    %389 = vst [vmem:[#allocation2 + $0x60] sm:$0xff] %v236
    %390 = vst [vmem:[#allocation2 + $0x68] sm:$0xff] %v238
    %391 = vst [vmem:[#allocation2 + $0x70] sm:$0xff] %v349
    %392 = vst [vmem:[#allocation2 + $0x78] sm:$0xff] %v351
    %393 = vst [vmem:[#allocation2 + $0x80] sm:$0xff] %v242
    %394 = vst [vmem:[#allocation2 + $0x88] sm:$0xff] %v244
    %395 = vst [vmem:[#allocation2 + $0x90] sm:$0xff] %v355
    %396 = vst [vmem:[#allocation2 + $0x98] sm:$0xff] %v357
    %397 = vst [vmem:[#allocation2 + $0xa0] sm:$0xff] %v248
    %398 = vst [vmem:[#allocation2 + $0xa8] sm:$0xff] %v250
    %399 = vst [vmem:[#allocation2 + $0xb0] sm:$0xff] %v361
    %400 = vst [vmem:[#allocation2 + $0xb8] sm:$0xff] %v363
    %401 = vst [vmem:[#allocation2 + $0xc0] sm:$0xff] %v254
    %402 = vst [vmem:[#allocation2 + $0xc8] sm:$0xff] %v256
    %403 = vst [vmem:[#allocation2 + $0xd0] sm:$0xff] %v367
    %404 = vst [vmem:[#allocation2 + $0xd8] sm:$0xff] %v369
    %405 = vst [vmem:[#allocation2 + $0xe0] sm:$0xff] %v260
    %406 = vst [vmem:[#allocation2 + $0xe8] sm:$0xff] %v262
    %407 = vst [vmem:[#allocation2 + $0xf0] sm:$0xff] %v373
    %408 = vst [vmem:[#allocation2 + $0xf8] sm:$0xff] %v375
    %v409 = vld [vmem:[#allocation5] sm:$0xff]
    %v410 = vld [vmem:[#allocation5 + $0x8] sm:$0xff]
    %v411 = vld [vmem:[#allocation5 + $0x10] sm:$0xff]
    %v412 = vld [vmem:[#allocation5 + $0x18] sm:$0xff]
    %v413 = vld [vmem:[#allocation5 + $0x20] sm:$0xff]
    %v414 = vld [vmem:[#allocation5 + $0x28] sm:$0xff]
    %v415 = vld [vmem:[#allocation5 + $0x30] sm:$0xff]
    %v416 = vld [vmem:[#allocation5 + $0x38] sm:$0xff]
    %v417 = vld [vmem:[#allocation5 + $0x40] sm:$0xff]
    %v418 = vld [vmem:[#allocation5 + $0x48] sm:$0xff]
    %v419 = vld [vmem:[#allocation5 + $0x50] sm:$0xff]
    %v420 = vld [vmem:[#allocation5 + $0x58] sm:$0xff]
    %v421 = vld [vmem:[#allocation5 + $0x60] sm:$0xff]
    %v422 = vld [vmem:[#allocation5 + $0x68] sm:$0xff]
    %v423 = vld [vmem:[#allocation5 + $0x70] sm:$0xff]
    %v424 = vld [vmem:[#allocation5 + $0x78] sm:$0xff]
    %v425 = vld [vmem:[#allocation5 + $0x80] sm:$0xff]
    %v426 = vld [vmem:[#allocation5 + $0x88] sm:$0xff]
    %v427 = vld [vmem:[#allocation5 + $0x90] sm:$0xff]
    %v428 = vld [vmem:[#allocation5 + $0x98] sm:$0xff]
    %v429 = vld [vmem:[#allocation5 + $0xa0] sm:$0xff]
    %v430 = vld [vmem:[#allocation5 + $0xa8] sm:$0xff]
    %v431 = vld [vmem:[#allocation5 + $0xb0] sm:$0xff]
    %v432 = vld [vmem:[#allocation5 + $0xb8] sm:$0xff]
    %v433 = vld [vmem:[#allocation5 + $0xc0] sm:$0xff]
    %v434 = vld [vmem:[#allocation5 + $0xc8] sm:$0xff]
    %v435 = vld [vmem:[#allocation5 + $0xd0] sm:$0xff]
    %v436 = vld [vmem:[#allocation5 + $0xd8] sm:$0xff]
    %v437 = vld [vmem:[#allocation5 + $0xe0] sm:$0xff]
    %v438 = vld [vmem:[#allocation5 + $0xe8] sm:$0xff]
    %v439 = vld [vmem:[#allocation5 + $0xf0] sm:$0xff]
    %v440 = vld [vmem:[#allocation5 + $0xf8] sm:$0xff]
    %v441 = vld [vmem:[#allocation5 + $0x100] sm:$0xff]
    %v442 = vld [vmem:[#allocation5 + $0x108] sm:$0xff]
    %v443 = vld [vmem:[#allocation5 + $0x110] sm:$0xff]
    %v444 = vld [vmem:[#allocation5 + $0x118] sm:$0xff]
    %v445 = vld [vmem:[#allocation5 + $0x120] sm:$0xff]
    %v446 = vld [vmem:[#allocation5 + $0x128] sm:$0xff]
    %v447 = vld [vmem:[#allocation5 + $0x130] sm:$0xff]
    %v448 = vld [vmem:[#allocation5 + $0x138] sm:$0xff]
    %v449 = vld [vmem:[#allocation5 + $0x140] sm:$0xff]
    %v450 = vld [vmem:[#allocation5 + $0x148] sm:$0xff]
    %v451 = vld [vmem:[#allocation5 + $0x150] sm:$0xff]
    %v452 = vld [vmem:[#allocation5 + $0x158] sm:$0xff]
    %v453 = vld [vmem:[#allocation5 + $0x160] sm:$0xff]
    %v454 = vld [vmem:[#allocation5 + $0x168] sm:$0xff]
    %v455 = vld [vmem:[#allocation5 + $0x170] sm:$0xff]
    %v456 = vld [vmem:[#allocation5 + $0x178] sm:$0xff]
    %v457 = vld [vmem:[#allocation5 + $0x180] sm:$0xff]
    %v458 = vld [vmem:[#allocation5 + $0x188] sm:$0xff]
    %v459 = vld [vmem:[#allocation5 + $0x190] sm:$0xff]
    %v460 = vld [vmem:[#allocation5 + $0x198] sm:$0xff]
    %v461 = vld [vmem:[#allocation5 + $0x1a0] sm:$0xff]
    %v462 = vld [vmem:[#allocation5 + $0x1a8] sm:$0xff]
    %v463 = vld [vmem:[#allocation5 + $0x1b0] sm:$0xff]
    %v464 = vld [vmem:[#allocation5 + $0x1b8] sm:$0xff]
    %v465 = vld [vmem:[#allocation5 + $0x1c0] sm:$0xff]
    %v466 = vld [vmem:[#allocation5 + $0x1c8] sm:$0xff]
    %v467 = vld [vmem:[#allocation5 + $0x1d0] sm:$0xff]
    %v468 = vld [vmem:[#allocation5 + $0x1d8] sm:$0xff]
    %v469 = vld [vmem:[#allocation5 + $0x1e0] sm:$0xff]
    %v470 = vld [vmem:[#allocation5 + $0x1e8] sm:$0xff]
    %v471 = vld [vmem:[#allocation5 + $0x1f0] sm:$0xff]
    %v472 = vld [vmem:[#allocation5 + $0x1f8] sm:$0xff]
    %s473 = smul.u32 0, 4
    %s474 = smul.addr %s473, 8
    %s475 = scalar_lea.vmem [#allocation2], %s474
    %v476 = vld [vmem:[%s475] sm:$0xff]
    %v477 = vld [vmem:[%s475 + $0x8] sm:$0xff]
    %v478 = vld [vmem:[%s475 + $0x10] sm:$0xff]
    %v479 = vld [vmem:[%s475 + $0x18] sm:$0xff]
    %480 = vmatprep.subr.mxu0 %v410
    %481 = vmatpush1.msra.mxu0 %v409
    %482 = vmatprep.subr.mxu0 %v414
    %483 = vmatpush1.msra.mxu0 %v413
    %484 = vmatprep.subr.mxu0 %v418
    %485 = vmatpush1.msra.mxu0 %v417
    %486 = vmatprep.subr.mxu0 %v422
    %487 = vmatpush1.msra.mxu0 %v421
    %488 = vmatprep.subr.mxu0 %v426
    %489 = vmatpush1.msra.mxu0 %v425
    %490 = vmatprep.subr.mxu0 %v430
    %491 = vmatpush1.msra.mxu0 %v429
    %492 = vmatprep.subr.mxu0 %v434
    %493 = vmatpush1.msra.mxu0 %v433
    %494 = vmatprep.subr.mxu0 %v438
    %495 = vmatpush1.msra.mxu0 %v437
    %496 = vmatprep.subr.mxu0 %v442
    %497 = vmatpush1.msra.mxu0 %v441
    %498 = vmatprep.subr.mxu0 %v446
    %499 = vmatpush1.msra.mxu0 %v445
    %500 = vmatprep.subr.mxu0 %v450
    %501 = vmatpush1.msra.mxu0 %v449
    %502 = vmatprep.subr.mxu0 %v454
    %503 = vmatpush1.msra.mxu0 %v453
    %504 = vmatprep.subr.mxu0 %v458
    %505 = vmatpush1.msra.mxu0 %v457
    %506 = vmatprep.subr.mxu0 %v462
    %507 = vmatpush1.msra.mxu0 %v461
    %508 = vmatprep.subr.mxu0 %v466
    %509 = vmatpush1.msra.mxu0 %v465
    %510 = vmatprep.subr.mxu0 %v470
    %511 = vmatpush1.msra.mxu0 %v469
    %512 = vmatprep.subr.mxu0 0.0
    %513 = vmatpush1.msra.mxu0 0.0
    %514 = vmatprep.subr.mxu0 0.0
    %515 = vmatpush1.msra.mxu0 0.0
    %516 = vmatprep.subr.mxu0 0.0
    %517 = vmatpush1.msra.mxu0 0.0
    %518 = vmatprep.subr.mxu0 0.0
    %519 = vmatpush1.msra.mxu0 0.0
    %520 = vmatprep.subr.mxu0 0.0
    %521 = vmatpush1.msra.mxu0 0.0
    %522 = vmatprep.subr.mxu0 0.0
    %523 = vmatpush1.msra.mxu0 0.0
    %524 = vmatprep.subr.mxu0 0.0
    %525 = vmatpush1.msra.mxu0 0.0
    %526 = vmatprep.subr.mxu0 0.0
    %527 = vmatpush1.msra.mxu0 0.0
    %528 = vmatprep.subr.mxu0 0.0
    %529 = vmatpush1.msra.mxu0 0.0
    %530 = vmatprep.subr.mxu0 0.0
    %531 = vmatpush1.msra.mxu0 0.0
    %532 = vmatprep.subr.mxu0 0.0
    %533 = vmatpush1.msra.mxu0 0.0
    %534 = vmatprep.subr.mxu0 0.0
    %535 = vmatpush1.msra.mxu0 0.0
    %536 = vmatprep.subr.mxu0 0.0
    %537 = vmatpush1.msra.mxu0 0.0
    %538 = vmatprep.subr.mxu0 0.0
    %539 = vmatpush1.msra.mxu0 0.0
    %540 = vmatprep.subr.mxu0 0.0
    %541 = vmatpush1.msra.mxu0 0.0
    %542 = vmatprep.subr.mxu0 0.0
    %543 = vmatpush1.msra.mxu0 0.0
    %544 = vmatprep.mubr.f32.mxu0 0.0
    %545 = vmatmul.mubr.f32.gmra.mrb[0].mxu0 0.0
    %v546 = vpop.f32.mrb[0].mxu0
    %v547 = vadd.f32 0.0, %v546
    %v548 = vpop.f32.mrb[0].mxu0
    %v549 = vadd.f32 0.0, %v548
    %550 = vdwg.mxu0
    %551 = vmatprep.subr.mxu0 %v412
    %552 = vmatpush1.msra.mxu0 %v411
    %553 = vmatprep.subr.mxu0 %v416
    %554 = vmatpush1.msra.mxu0 %v415
    %555 = vmatprep.subr.mxu0 %v420
    %556 = vmatpush1.msra.mxu0 %v419
    %557 = vmatprep.subr.mxu0 %v424
    %558 = vmatpush1.msra.mxu0 %v423
    %559 = vmatprep.subr.mxu0 %v428
    %560 = vmatpush1.msra.mxu0 %v427
    %561 = vmatprep.subr.mxu0 %v432
    %562 = vmatpush1.msra.mxu0 %v431
    %563 = vmatprep.subr.mxu0 %v436
    %564 = vmatpush1.msra.mxu0 %v435
    %565 = vmatprep.subr.mxu0 %v440
    %566 = vmatpush1.msra.mxu0 %v439
    %567 = vmatprep.subr.mxu0 %v444
    %568 = vmatpush1.msra.mxu0 %v443
    %569 = vmatprep.subr.mxu0 %v448
    %570 = vmatpush1.msra.mxu0 %v447
    %571 = vmatprep.subr.mxu0 %v452
    %572 = vmatpush1.msra.mxu0 %v451
    %573 = vmatprep.subr.mxu0 %v456
    %574 = vmatpush1.msra.mxu0 %v455
    %575 = vmatprep.subr.mxu0 %v460
    %576 = vmatpush1.msra.mxu0 %v459
    %577 = vmatprep.subr.mxu0 %v464
    %578 = vmatpush1.msra.mxu0 %v463
    %579 = vmatprep.subr.mxu0 %v468
    %580 = vmatpush1.msra.mxu0 %v467
    %581 = vmatprep.subr.mxu0 %v472
    %582 = vmatpush1.msra.mxu0 %v471
    %583 = vmatprep.subr.mxu0 0.0
    %584 = vmatpush1.msra.mxu0 0.0
    %585 = vmatprep.subr.mxu0 0.0
    %586 = vmatpush1.msra.mxu0 0.0
    %587 = vmatprep.subr.mxu0 0.0
    %588 = vmatpush1.msra.mxu0 0.0
    %589 = vmatprep.subr.mxu0 0.0
    %590 = vmatpush1.msra.mxu0 0.0
    %591 = vmatprep.subr.mxu0 0.0
    %592 = vmatpush1.msra.mxu0 0.0
    %593 = vmatprep.subr.mxu0 0.0
    %594 = vmatpush1.msra.mxu0 0.0
    %595 = vmatprep.subr.mxu0 0.0
    %596 = vmatpush1.msra.mxu0 0.0
    %597 = vmatprep.subr.mxu0 0.0
    %598 = vmatpush1.msra.mxu0 0.0
    %599 = vmatprep.subr.mxu0 0.0
    %600 = vmatpush1.msra.mxu0 0.0
    %601 = vmatprep.subr.mxu0 0.0
    %602 = vmatpush1.msra.mxu0 0.0
    %603 = vmatprep.subr.mxu0 0.0
    %604 = vmatpush1.msra.mxu0 0.0
    %605 = vmatprep.subr.mxu0 0.0
    %606 = vmatpush1.msra.mxu0 0.0
    %607 = vmatprep.subr.mxu0 0.0
    %608 = vmatpush1.msra.mxu0 0.0
    %609 = vmatprep.subr.mxu0 0.0
    %610 = vmatpush1.msra.mxu0 0.0
    %611 = vmatprep.subr.mxu0 0.0
    %612 = vmatpush1.msra.mxu0 0.0
    %613 = vmatprep.subr.mxu0 0.0
    %614 = vmatpush1.msra.mxu0 0.0
    %615 = vmatprep.mubr.f32.mxu0 0.0
    %616 = vmatmul.mubr.f32.gmra.mrb[0].mxu0 0.0
    %v617 = vpop.f32.mrb[0].mxu0
    %v618 = vadd.f32 0.0, %v617
    %v619 = vpop.f32.mrb[0].mxu0
    %v620 = vadd.f32 0.0, %v619
    %621 = vdwg.mxu0
    %v622 = vadd.f32 %v476, %v547
    %v623 = vadd.f32 %v477, %v549
    %v624 = vadd.f32 %v478, %v618
    %v625 = vadd.f32 %v479, %v620
    %v626 = vxor.u32 %v622, 2147483648
    %v627 = vmul.f32 %v626, 1.442695
    %v628 = vpow.pop %v627
    %v629 = vadd.f32 %v628, 1.0
    %v630 = vrcp.pop %v629
    %v631 = vmul.f32 1.0, %v630
    %v632 = vxor.u32 %v623, 2147483648
    %v633 = vmul.f32 %v632, 1.442695
    %v634 = vpow.pop %v633
    %v635 = vadd.f32 %v634, 1.0
    %v636 = vrcp.pop %v635
    %v637 = vmul.f32 1.0, %v636
    %v638 = vtanh.pop %v624
    %v639 = vxor.u32 %v625, 2147483648
    %v640 = vmul.f32 %v639, 1.442695
    %v641 = vpow.pop %v640
    %v642 = vadd.f32 %v641, 1.0
    %v643 = vrcp.pop %v642
    %v644 = vmul.f32 1.0, %v643
    %v645 = vmul.f32 %v637, 0.0
    %v646 = vmul.f32 %v631, %v638
    %v647 = vadd.f32 %v645, %v646
    %v648 = vtanh.pop %v647
    %v649 = vmul.f32 %v644, %v648
    %s650 = smul.u32 1, 4
    %s651 = smul.addr %s650, 8
    %s652 = scalar_lea.vmem [#allocation2], %s651
    %v653 = vld [vmem:[%s652] sm:$0xff]
    %v654 = vld [vmem:[%s652 + $0x8] sm:$0xff]
    %v655 = vld [vmem:[%s652 + $0x10] sm:$0xff]
    %v656 = vld [vmem:[%s652 + $0x18] sm:$0xff]
    %657 = vmatprep.subr.mxu0 %v410
    %658 = vmatpush1.msra.mxu0 %v409
    %659 = vmatprep.subr.mxu0 %v414
    %660 = vmatpush1.msra.mxu0 %v413
    %661 = vmatprep.subr.mxu0 %v418
    %662 = vmatpush1.msra.mxu0 %v417
    %663 = vmatprep.subr.mxu0 %v422
    %664 = vmatpush1.msra.mxu0 %v421
    %665 = vmatprep.subr.mxu0 %v426
    %666 = vmatpush1.msra.mxu0 %v425
    %667 = vmatprep.subr.mxu0 %v430
    %668 = vmatpush1.msra.mxu0 %v429
    %669 = vmatprep.subr.mxu0 %v434
    %670 = vmatpush1.msra.mxu0 %v433
    %671 = vmatprep.subr.mxu0 %v438
    %672 = vmatpush1.msra.mxu0 %v437
    %673 = vmatprep.subr.mxu0 %v442
    %674 = vmatpush1.msra.mxu0 %v441
    %675 = vmatprep.subr.mxu0 %v446
    %676 = vmatpush1.msra.mxu0 %v445
    %677 = vmatprep.subr.mxu0 %v450
    %678 = vmatpush1.msra.mxu0 %v449
    %679 = vmatprep.subr.mxu0 %v454
    %680 = vmatpush1.msra.mxu0 %v453
    %681 = vmatprep.subr.mxu0 %v458
    %682 = vmatpush1.msra.mxu0 %v457
    %683 = vmatprep.subr.mxu0 %v462
    %684 = vmatpush1.msra.mxu0 %v461
    %685 = vmatprep.subr.mxu0 %v466
    %686 = vmatpush1.msra.mxu0 %v465
    %687 = vmatprep.subr.mxu0 %v470
    %688 = vmatpush1.msra.mxu0 %v469
    %689 = vmatprep.subr.mxu0 0.0
    %690 = vmatpush1.msra.mxu0 0.0
    %691 = vmatprep.subr.mxu0 0.0
    %692 = vmatpush1.msra.mxu0 0.0
    %693 = vmatprep.subr.mxu0 0.0
    %694 = vmatpush1.msra.mxu0 0.0
    %695 = vmatprep.subr.mxu0 0.0
    %696 = vmatpush1.msra.mxu0 0.0
    %697 = vmatprep.subr.mxu0 0.0
    %698 = vmatpush1.msra.mxu0 0.0
    %699 = vmatprep.subr.mxu0 0.0
    %700 = vmatpush1.msra.mxu0 0.0
    %701 = vmatprep.subr.mxu0 0.0
    %702 = vmatpush1.msra.mxu0 0.0
    %703 = vmatprep.subr.mxu0 0.0
    %704 = vmatpush1.msra.mxu0 0.0
    %705 = vmatprep.subr.mxu0 0.0
    %706 = vmatpush1.msra.mxu0 0.0
    %707 = vmatprep.subr.mxu0 0.0
    %708 = vmatpush1.msra.mxu0 0.0
    %709 = vmatprep.subr.mxu0 0.0
    %710 = vmatpush1.msra.mxu0 0.0
    %711 = vmatprep.subr.mxu0 0.0
    %712 = vmatpush1.msra.mxu0 0.0
    %713 = vmatprep.subr.mxu0 0.0
    %714 = vmatpush1.msra.mxu0 0.0
    %715 = vmatprep.subr.mxu0 0.0
    %716 = vmatpush1.msra.mxu0 0.0
    %717 = vmatprep.subr.mxu0 0.0
    %718 = vmatpush1.msra.mxu0 0.0
    %719 = vmatprep.subr.mxu0 0.0
    %720 = vmatpush1.msra.mxu0 0.0
    %721 = vmatprep.mubr.f32.mxu0 0.0
    %722 = vmatmul.mubr.f32.gmra.mrb[0].mxu0 %v649
    %v723 = vpop.f32.mrb[0].mxu0
    %v724 = vadd.f32 0.0, %v723
    %v725 = vpop.f32.mrb[0].mxu0
    %v726 = vadd.f32 0.0, %v725
    %727 = vdwg.mxu0
    %728 = vmatprep.subr.mxu0 %v412
    %729 = vmatpush1.msra.mxu0 %v411
    %730 = vmatprep.subr.mxu0 %v416
    %731 = vmatpush1.msra.mxu0 %v415
    %732 = vmatprep.subr.mxu0 %v420
    %733 = vmatpush1.msra.mxu0 %v419
    %734 = vmatprep.subr.mxu0 %v424
    %735 = vmatpush1.msra.mxu0 %v423
    %736 = vmatprep.subr.mxu0 %v428
    %737 = vmatpush1.msra.mxu0 %v427
    %738 = vmatprep.subr.mxu0 %v432
    %739 = vmatpush1.msra.mxu0 %v431
    %740 = vmatprep.subr.mxu0 %v436
    %741 = vmatpush1.msra.mxu0 %v435
    %742 = vmatprep.subr.mxu0 %v440
    %743 = vmatpush1.msra.mxu0 %v439
    %744 = vmatprep.subr.mxu0 %v444
    %745 = vmatpush1.msra.mxu0 %v443
    %746 = vmatprep.subr.mxu0 %v448
    %747 = vmatpush1.msra.mxu0 %v447
    %748 = vmatprep.subr.mxu0 %v452
    %749 = vmatpush1.msra.mxu0 %v451
    %750 = vmatprep.subr.mxu0 %v456
    %751 = vmatpush1.msra.mxu0 %v455
    %752 = vmatprep.subr.mxu0 %v460
    %753 = vmatpush1.msra.mxu0 %v459
    %754 = vmatprep.subr.mxu0 %v464
    %755 = vmatpush1.msra.mxu0 %v463
    %756 = vmatprep.subr.mxu0 %v468
    %757 = vmatpush1.msra.mxu0 %v467
    %758 = vmatprep.subr.mxu0 %v472
    %759 = vmatpush1.msra.mxu0 %v471
    %760 = vmatprep.subr.mxu0 0.0
    %761 = vmatpush1.msra.mxu0 0.0
    %762 = vmatprep.subr.mxu0 0.0
    %763 = vmatpush1.msra.mxu0 0.0
    %764 = vmatprep.subr.mxu0 0.0
    %765 = vmatpush1.msra.mxu0 0.0
    %766 = vmatprep.subr.mxu0 0.0
    %767 = vmatpush1.msra.mxu0 0.0
    %768 = vmatprep.subr.mxu0 0.0
    %769 = vmatpush1.msra.mxu0 0.0
    %770 = vmatprep.subr.mxu0 0.0
    %771 = vmatpush1.msra.mxu0 0.0
    %772 = vmatprep.subr.mxu0 0.0
    %773 = vmatpush1.msra.mxu0 0.0
    %774 = vmatprep.subr.mxu0 0.0
    %775 = vmatpush1.msra.mxu0 0.0
    %776 = vmatprep.subr.mxu0 0.0
    %777 = vmatpush1.msra.mxu0 0.0
    %778 = vmatprep.subr.mxu0 0.0
    %779 = vmatpush1.msra.mxu0 0.0
    %780 = vmatprep.subr.mxu0 0.0
    %781 = vmatpush1.msra.mxu0 0.0
    %782 = vmatprep.subr.mxu0 0.0
    %783 = vmatpush1.msra.mxu0 0.0
    %784 = vmatprep.subr.mxu0 0.0
    %785 = vmatpush1.msra.mxu0 0.0
    %786 = vmatprep.subr.mxu0 0.0
    %787 = vmatpush1.msra.mxu0 0.0
    %788 = vmatprep.subr.mxu0 0.0
    %789 = vmatpush1.msra.mxu0 0.0
    %790 = vmatprep.subr.mxu0 0.0
    %791 = vmatpush1.msra.mxu0 0.0
    %792 = vmatprep.mubr.f32.mxu0 0.0
    %793 = vmatmul.mubr.f32.gmra.mrb[0].mxu0 %v649
    %v794 = vpop.f32.mrb[0].mxu0
    %v795 = vadd.f32 0.0, %v794
    %v796 = vpop.f32.mrb[0].mxu0
    %v797 = vadd.f32 0.0, %v796
    %798 = vdwg.mxu0
    %v799 = vadd.f32 %v653, %v724
    %v800 = vadd.f32 %v654, %v726
    %v801 = vadd.f32 %v655, %v795
    %v802 = vadd.f32 %v656, %v797
    %v803 = vxor.u32 %v799, 2147483648
    %v804 = vmul.f32 %v803, 1.442695
    %v805 = vpow.pop %v804
    %v806 = vadd.f32 %v805, 1.0
    %v807 = vrcp.pop %v806
    %v808 = vmul.f32 1.0, %v807
    %v809 = vxor.u32 %v800, 2147483648
    %v810 = vmul.f32 %v809, 1.442695
    %v811 = vpow.pop %v810
    %v812 = vadd.f32 %v811, 1.0
    %v813 = vrcp.pop %v812
    %v814 = vmul.f32 1.0, %v813
    %v815 = vtanh.pop %v801
    %v816 = vxor.u32 %v802, 2147483648
    %v817 = vmul.f32 %v816, 1.442695
    %v818 = vpow.pop %v817
    %v819 = vadd.f32 %v818, 1.0
    %v820 = vrcp.pop %v819
    %v821 = vmul.f32 1.0, %v820
    %v822 = vmul.f32 %v814, %v647
    %v823 = vmul.f32 %v808, %v815
    %v824 = vadd.f32 %v822, %v823
    %v825 = vtanh.pop %v824
    %v826 = vmul.f32 %v821, %v825
    %s827 = smul.u32 2, 4
    %s828 = smul.addr %s827, 8
    %s829 = scalar_lea.vmem [#allocation2], %s828
    %v830 = vld [vmem:[%s829] sm:$0xff]
    %v831 = vld [vmem:[%s829 + $0x8] sm:$0xff]
    %v832 = vld [vmem:[%s829 + $0x10] sm:$0xff]
    %v833 = vld [vmem:[%s829 + $0x18] sm:$0xff]
    %834 = vmatprep.subr.mxu0 %v410
    %835 = vmatpush1.msra.mxu0 %v409
    %836 = vmatprep.subr.mxu0 %v414
    %837 = vmatpush1.msra.mxu0 %v413
    %838 = vmatprep.subr.mxu0 %v418
    %839 = vmatpush1.msra.mxu0 %v417
    %840 = vmatprep.subr.mxu0 %v422
    %841 = vmatpush1.msra.mxu0 %v421
    %842 = vmatprep.subr.mxu0 %v426
    %843 = vmatpush1.msra.mxu0 %v425
    %844 = vmatprep.subr.mxu0 %v430
    %845 = vmatpush1.msra.mxu0 %v429
    %846 = vmatprep.subr.mxu0 %v434
    %847 = vmatpush1.msra.mxu0 %v433
    %848 = vmatprep.subr.mxu0 %v438
    %849 = vmatpush1.msra.mxu0 %v437
    %850 = vmatprep.subr.mxu0 %v442
    %851 = vmatpush1.msra.mxu0 %v441
    %852 = vmatprep.subr.mxu0 %v446
    %853 = vmatpush1.msra.mxu0 %v445
    %854 = vmatprep.subr.mxu0 %v450
    %855 = vmatpush1.msra.mxu0 %v449
    %856 = vmatprep.subr.mxu0 %v454
    %857 = vmatpush1.msra.mxu0 %v453
    %858 = vmatprep.subr.mxu0 %v458
    %859 = vmatpush1.msra.mxu0 %v457
    %860 = vmatprep.subr.mxu0 %v462
    %861 = vmatpush1.msra.mxu0 %v461
    %862 = vmatprep.subr.mxu0 %v466
    %863 = vmatpush1.msra.mxu0 %v465
    %864 = vmatprep.subr.mxu0 %v470
    %865 = vmatpush1.msra.mxu0 %v469
    %866 = vmatprep.subr.mxu0 0.0
    %867 = vmatpush1.msra.mxu0 0.0
    %868 = vmatprep.subr.mxu0 0.0
    %869 = vmatpush1.msra.mxu0 0.0
    %870 = vmatprep.subr.mxu0 0.0
    %871 = vmatpush1.msra.mxu0 0.0
    %872 = vmatprep.subr.mxu0 0.0
    %873 = vmatpush1.msra.mxu0 0.0
    %874 = vmatprep.subr.mxu0 0.0
    %875 = vmatpush1.msra.mxu0 0.0
    %876 = vmatprep.subr.mxu0 0.0
    %877 = vmatpush1.msra.mxu0 0.0
    %878 = vmatprep.subr.mxu0 0.0
    %879 = vmatpush1.msra.mxu0 0.0
    %880 = vmatprep.subr.mxu0 0.0
    %881 = vmatpush1.msra.mxu0 0.0
    %882 = vmatprep.subr.mxu0 0.0
    %883 = vmatpush1.msra.mxu0 0.0
    %884 = vmatprep.subr.mxu0 0.0
    %885 = vmatpush1.msra.mxu0 0.0
    %886 = vmatprep.subr.mxu0 0.0
    %887 = vmatpush1.msra.mxu0 0.0
    %888 = vmatprep.subr.mxu0 0.0
    %889 = vmatpush1.msra.mxu0 0.0
    %890 = vmatprep.subr.mxu0 0.0
    %891 = vmatpush1.msra.mxu0 0.0
    %892 = vmatprep.subr.mxu0 0.0
    %893 = vmatpush1.msra.mxu0 0.0
    %894 = vmatprep.subr.mxu0 0.0
    %895 = vmatpush1.msra.mxu0 0.0
    %896 = vmatprep.subr.mxu0 0.0
    %897 = vmatpush1.msra.mxu0 0.0
    %898 = vmatprep.mubr.f32.mxu0 0.0
    %899 = vmatmul.mubr.f32.gmra.mrb[0].mxu0 %v826
    %v900 = vpop.f32.mrb[0].mxu0
    %v901 = vadd.f32 0.0, %v900
    %v902 = vpop.f32.mrb[0].mxu0
    %v903 = vadd.f32 0.0, %v902
    %904 = vdwg.mxu0
    %905 = vmatprep.subr.mxu0 %v412
    %906 = vmatpush1.msra.mxu0 %v411
    %907 = vmatprep.subr.mxu0 %v416
    %908 = vmatpush1.msra.mxu0 %v415
    %909 = vmatprep.subr.mxu0 %v420
    %910 = vmatpush1.msra.mxu0 %v419
    %911 = vmatprep.subr.mxu0 %v424
    %912 = vmatpush1.msra.mxu0 %v423
    %913 = vmatprep.subr.mxu0 %v428
    %914 = vmatpush1.msra.mxu0 %v427
    %915 = vmatprep.subr.mxu0 %v432
    %916 = vmatpush1.msra.mxu0 %v431
    %917 = vmatprep.subr.mxu0 %v436
    %918 = vmatpush1.msra.mxu0 %v435
    %919 = vmatprep.subr.mxu0 %v440
    %920 = vmatpush1.msra.mxu0 %v439
    %921 = vmatprep.subr.mxu0 %v444
    %922 = vmatpush1.msra.mxu0 %v443
    %923 = vmatprep.subr.mxu0 %v448
    %924 = vmatpush1.msra.mxu0 %v447
    %925 = vmatprep.subr.mxu0 %v452
    %926 = vmatpush1.msra.mxu0 %v451
    %927 = vmatprep.subr.mxu0 %v456
    %928 = vmatpush1.msra.mxu0 %v455
    %929 = vmatprep.subr.mxu0 %v460
    %930 = vmatpush1.msra.mxu0 %v459
    %931 = vmatprep.subr.mxu0 %v464
    %932 = vmatpush1.msra.mxu0 %v463
    %933 = vmatprep.subr.mxu0 %v468
    %934 = vmatpush1.msra.mxu0 %v467
    %935 = vmatprep.subr.mxu0 %v472
    %936 = vmatpush1.msra.mxu0 %v471
    %937 = vmatprep.subr.mxu0 0.0
    %938 = vmatpush1.msra.mxu0 0.0
    %939 = vmatprep.subr.mxu0 0.0
    %940 = vmatpush1.msra.mxu0 0.0
    %941 = vmatprep.subr.mxu0 0.0
    %942 = vmatpush1.msra.mxu0 0.0
    %943 = vmatprep.subr.mxu0 0.0
    %944 = vmatpush1.msra.mxu0 0.0
    %945 = vmatprep.subr.mxu0 0.0
    %946 = vmatpush1.msra.mxu0 0.0
    %947 = vmatprep.subr.mxu0 0.0
    %948 = vmatpush1.msra.mxu0 0.0
    %949 = vmatprep.subr.mxu0 0.0
    %950 = vmatpush1.msra.mxu0 0.0
    %951 = vmatprep.subr.mxu0 0.0
    %952 = vmatpush1.msra.mxu0 0.0
    %953 = vmatprep.subr.mxu0 0.0
    %954 = vmatpush1.msra.mxu0 0.0
    %955 = vmatprep.subr.mxu0 0.0
    %956 = vmatpush1.msra.mxu0 0.0
    %957 = vmatprep.subr.mxu0 0.0
    %958 = vmatpush1.msra.mxu0 0.0
    %959 = vmatprep.subr.mxu0 0.0
    %960 = vmatpush1.msra.mxu0 0.0
    %961 = vmatprep.subr.mxu0 0.0
    %962 = vmatpush1.msra.mxu0 0.0
    %963 = vmatprep.subr.mxu0 0.0
    %964 = vmatpush1.msra.mxu0 0.0
    %965 = vmatprep.subr.mxu0 0.0
    %966 = vmatpush1.msra.mxu0 0.0
    %967 = vmatprep.subr.mxu0 0.0
    %968 = vmatpush1.msra.mxu0 0.0
    %969 = vmatprep.mubr.f32.mxu0 0.0
    %970 = vmatmul.mubr.f32.gmra.mrb[0].mxu0 %v826
    %v971 = vpop.f32.mrb[0].mxu0
    %v972 = vadd.f32 0.0, %v971
    %v973 = vpop.f32.mrb[0].mxu0
    %v974 = vadd.f32 0.0, %v973
    %975 = vdwg.mxu0
    %v976 = vadd.f32 %v830, %v901
    %v977 = vadd.f32 %v831, %v903
    %v978 = vadd.f32 %v832, %v972
    %v979 = vadd.f32 %v833, %v974
    %v980 = vxor.u32 %v976, 2147483648
    %v981 = vmul.f32 %v980, 1.442695
    %v982 = vpow.pop %v981
    %v983 = vadd.f32 %v982, 1.0
    %v984 = vrcp.pop %v983
    %v985 = vmul.f32 1.0, %v984
    %v986 = vxor.u32 %v977, 2147483648
    %v987 = vmul.f32 %v986, 1.442695
    %v988 = vpow.pop %v987
    %v989 = vadd.f32 %v988, 1.0
    %v990 = vrcp.pop %v989
    %v991 = vmul.f32 1.0, %v990
    %v992 = vtanh.pop %v978
    %v993 = vxor.u32 %v979, 2147483648
    %v994 = vmul.f32 %v993, 1.442695
    %v995 = vpow.pop %v994
    %v996 = vadd.f32 %v995, 1.0
    %v997 = vrcp.pop %v996
    %v998 = vmul.f32 1.0, %v997
    %v999 = vmul.f32 %v991, %v824
    %v1000 = vmul.f32 %v985, %v992
    %v1001 = vadd.f32 %v999, %v1000
    %v1002 = vtanh.pop %v1001
    %v1003 = vmul.f32 %v998, %v1002
    %s1004 = smul.u32 3, 4
    %s1005 = smul.addr %s1004, 8
    %s1006 = scalar_lea.vmem [#allocation2], %s1005
    %v1007 = vld [vmem:[%s1006] sm:$0xff]
    %v1008 = vld [vmem:[%s1006 + $0x8] sm:$0xff]
    %v1009 = vld [vmem:[%s1006 + $0x10] sm:$0xff]
    %v1010 = vld [vmem:[%s1006 + $0x18] sm:$0xff]
    %1011 = vmatprep.subr.mxu0 %v410
    %1012 = vmatpush1.msra.mxu0 %v409
    %1013 = vmatprep.subr.mxu0 %v414
    %1014 = vmatpush1.msra.mxu0 %v413
    %1015 = vmatprep.subr.mxu0 %v418
    %1016 = vmatpush1.msra.mxu0 %v417
    %1017 = vmatprep.subr.mxu0 %v422
    %1018 = vmatpush1.msra.mxu0 %v421
    %1019 = vmatprep.subr.mxu0 %v426
    %1020 = vmatpush1.msra.mxu0 %v425
    %1021 = vmatprep.subr.mxu0 %v430
    %1022 = vmatpush1.msra.mxu0 %v429
    %1023 = vmatprep.subr.mxu0 %v434
    %1024 = vmatpush1.msra.mxu0 %v433
    %1025 = vmatprep.subr.mxu0 %v438
    %1026 = vmatpush1.msra.mxu0 %v437
    %1027 = vmatprep.subr.mxu0 %v442
    %1028 = vmatpush1.msra.mxu0 %v441
    %1029 = vmatprep.subr.mxu0 %v446
    %1030 = vmatpush1.msra.mxu0 %v445
    %1031 = vmatprep.subr.mxu0 %v450
    %1032 = vmatpush1.msra.mxu0 %v449
    %1033 = vmatprep.subr.mxu0 %v454
    %1034 = vmatpush1.msra.mxu0 %v453
    %1035 = vmatprep.subr.mxu0 %v458
    %1036 = vmatpush1.msra.mxu0 %v457
    %1037 = vmatprep.subr.mxu0 %v462
    %1038 = vmatpush1.msra.mxu0 %v461
    %1039 = vmatprep.subr.mxu0 %v466
    %1040 = vmatpush1.msra.mxu0 %v465
    %1041 = vmatprep.subr.mxu0 %v470
    %1042 = vmatpush1.msra.mxu0 %v469
    %1043 = vmatprep.subr.mxu0 0.0
    %1044 = vmatpush1.msra.mxu0 0.0
    %1045 = vmatprep.subr.mxu0 0.0
    %1046 = vmatpush1.msra.mxu0 0.0
    %1047 = vmatprep.subr.mxu0 0.0
    %1048 = vmatpush1.msra.mxu0 0.0
    %1049 = vmatprep.subr.mxu0 0.0
    %1050 = vmatpush1.msra.mxu0 0.0
    %1051 = vmatprep.subr.mxu0 0.0
    %1052 = vmatpush1.msra.mxu0 0.0
    %1053 = vmatprep.subr.mxu0 0.0
    %1054 = vmatpush1.msra.mxu0 0.0
    %1055 = vmatprep.subr.mxu0 0.0
    %1056 = vmatpush1.msra.mxu0 0.0
    %1057 = vmatprep.subr.mxu0 0.0
    %1058 = vmatpush1.msra.mxu0 0.0
    %1059 = vmatprep.subr.mxu0 0.0
    %1060 = vmatpush1.msra.mxu0 0.0
    %1061 = vmatprep.subr.mxu0 0.0
    %1062 = vmatpush1.msra.mxu0 0.0
    %1063 = vmatprep.subr.mxu0 0.0
    %1064 = vmatpush1.msra.mxu0 0.0
    %1065 = vmatprep.subr.mxu0 0.0
    %1066 = vmatpush1.msra.mxu0 0.0
    %1067 = vmatprep.subr.mxu0 0.0
    %1068 = vmatpush1.msra.mxu0 0.0
    %1069 = vmatprep.subr.mxu0 0.0
    %1070 = vmatpush1.msra.mxu0 0.0
    %1071 = vmatprep.subr.mxu0 0.0
    %1072 = vmatpush1.msra.mxu0 0.0
    %1073 = vmatprep.subr.mxu0 0.0
    %1074 = vmatpush1.msra.mxu0 0.0
    %1075 = vmatprep.mubr.f32.mxu0 0.0
    %1076 = vmatmul.mubr.f32.gmra.mrb[0].mxu0 %v1003
    %v1077 = vpop.f32.mrb[0].mxu0
    %v1078 = vadd.f32 0.0, %v1077
    %v1079 = vpop.f32.mrb[0].mxu0
    %v1080 = vadd.f32 0.0, %v1079
    %1081 = vdwg.mxu0
    %1082 = vmatprep.subr.mxu0 %v412
    %1083 = vmatpush1.msra.mxu0 %v411
    %1084 = vmatprep.subr.mxu0 %v416
    %1085 = vmatpush1.msra.mxu0 %v415
    %1086 = vmatprep.subr.mxu0 %v420
    %1087 = vmatpush1.msra.mxu0 %v419
    %1088 = vmatprep.subr.mxu0 %v424
    %1089 = vmatpush1.msra.mxu0 %v423
    %1090 = vmatprep.subr.mxu0 %v428
    %1091 = vmatpush1.msra.mxu0 %v427
    %1092 = vmatprep.subr.mxu0 %v432
    %1093 = vmatpush1.msra.mxu0 %v431
    %1094 = vmatprep.subr.mxu0 %v436
    %1095 = vmatpush1.msra.mxu0 %v435
    %1096 = vmatprep.subr.mxu0 %v440
    %1097 = vmatpush1.msra.mxu0 %v439
    %1098 = vmatprep.subr.mxu0 %v444
    %1099 = vmatpush1.msra.mxu0 %v443
    %1100 = vmatprep.subr.mxu0 %v448
    %1101 = vmatpush1.msra.mxu0 %v447
    %1102 = vmatprep.subr.mxu0 %v452
    %1103 = vmatpush1.msra.mxu0 %v451
    %1104 = vmatprep.subr.mxu0 %v456
    %1105 = vmatpush1.msra.mxu0 %v455
    %1106 = vmatprep.subr.mxu0 %v460
    %1107 = vmatpush1.msra.mxu0 %v459
    %1108 = vmatprep.subr.mxu0 %v464
    %1109 = vmatpush1.msra.mxu0 %v463
    %1110 = vmatprep.subr.mxu0 %v468
    %1111 = vmatpush1.msra.mxu0 %v467
    %1112 = vmatprep.subr.mxu0 %v472
    %1113 = vmatpush1.msra.mxu0 %v471
    %1114 = vmatprep.subr.mxu0 0.0
    %1115 = vmatpush1.msra.mxu0 0.0
    %1116 = vmatprep.subr.mxu0 0.0
    %1117 = vmatpush1.msra.mxu0 0.0
    %1118 = vmatprep.subr.mxu0 0.0
    %1119 = vmatpush1.msra.mxu0 0.0
    %1120 = vmatprep.subr.mxu0 0.0
    %1121 = vmatpush1.msra.mxu0 0.0
    %1122 = vmatprep.subr.mxu0 0.0
    %1123 = vmatpush1.msra.mxu0 0.0
    %1124 = vmatprep.subr.mxu0 0.0
    %1125 = vmatpush1.msra.mxu0 0.0
    %1126 = vmatprep.subr.mxu0 0.0
    %1127 = vmatpush1.msra.mxu0 0.0
    %1128 = vmatprep.subr.mxu0 0.0
    %1129 = vmatpush1.msra.mxu0 0.0
    %1130 = vmatprep.subr.mxu0 0.0
    %1131 = vmatpush1.msra.mxu0 0.0
    %1132 = vmatprep.subr.mxu0 0.0
    %1133 = vmatpush1.msra.mxu0 0.0
    %1134 = vmatprep.subr.mxu0 0.0
    %1135 = vmatpush1.msra.mxu0 0.0
    %1136 = vmatprep.subr.mxu0 0.0
    %1137 = vmatpush1.msra.mxu0 0.0
    %1138 = vmatprep.subr.mxu0 0.0
    %1139 = vmatpush1.msra.mxu0 0.0
    %1140 = vmatprep.subr.mxu0 0.0
    %1141 = vmatpush1.msra.mxu0 0.0
    %1142 = vmatprep.subr.mxu0 0.0
    %1143 = vmatpush1.msra.mxu0 0.0
    %1144 = vmatprep.subr.mxu0 0.0
    %1145 = vmatpush1.msra.mxu0 0.0
    %1146 = vmatprep.mubr.f32.mxu0 0.0
    %1147 = vmatmul.mubr.f32.gmra.mrb[0].mxu0 %v1003
    %v1148 = vpop.f32.mrb[0].mxu0
    %v1149 = vadd.f32 0.0, %v1148
    %v1150 = vpop.f32.mrb[0].mxu0
    %v1151 = vadd.f32 0.0, %v1150
    %1152 = vdwg.mxu0
    %v1153 = vadd.f32 %v1007, %v1078
    %v1154 = vadd.f32 %v1008, %v1080
    %v1155 = vadd.f32 %v1009, %v1149
    %v1156 = vadd.f32 %v1010, %v1151
    %v1157 = vxor.u32 %v1153, 2147483648
    %v1158 = vmul.f32 %v1157, 1.442695
    %v1159 = vpow.pop %v1158
    %v1160 = vadd.f32 %v1159, 1.0
    %v1161 = vrcp.pop %v1160
    %v1162 = vmul.f32 1.0, %v1161
    %v1163 = vxor.u32 %v1154, 2147483648
    %v1164 = vmul.f32 %v1163, 1.442695
    %v1165 = vpow.pop %v1164
    %v1166 = vadd.f32 %v1165, 1.0
    %v1167 = vrcp.pop %v1166
    %v1168 = vmul.f32 1.0, %v1167
    %v1169 = vtanh.pop %v1155
    %v1170 = vxor.u32 %v1156, 2147483648
    %v1171 = vmul.f32 %v1170, 1.442695
    %v1172 = vpow.pop %v1171
    %v1173 = vadd.f32 %v1172, 1.0
    %v1174 = vrcp.pop %v1173
    %v1175 = vmul.f32 1.0, %v1174
    %v1176 = vmul.f32 %v1168, %v1001
    %v1177 = vmul.f32 %v1162, %v1169
    %v1178 = vadd.f32 %v1176, %v1177
    %v1179 = vtanh.pop %v1178
    %v1180 = vmul.f32 %v1175, %v1179
    %s1181 = smul.u32 4, 4
    %s1182 = smul.addr %s1181, 8
    %s1183 = scalar_lea.vmem [#allocation2], %s1182
    %v1184 = vld [vmem:[%s1183] sm:$0xff]
    %v1185 = vld [vmem:[%s1183 + $0x8] sm:$0xff]
    %v1186 = vld [vmem:[%s1183 + $0x10] sm:$0xff]
    %v1187 = vld [vmem:[%s1183 + $0x18] sm:$0xff]
    %1188 = vmatprep.subr.mxu0 %v410
    %1189 = vmatpush1.msra.mxu0 %v409
    %1190 = vmatprep.subr.mxu0 %v414
    %1191 = vmatpush1.msra.mxu0 %v413
    %1192 = vmatprep.subr.mxu0 %v418
    %1193 = vmatpush1.msra.mxu0 %v417
    %1194 = vmatprep.subr.mxu0 %v422
    %1195 = vmatpush1.msra.mxu0 %v421
    %1196 = vmatprep.subr.mxu0 %v426
    %1197 = vmatpush1.msra.mxu0 %v425
    %1198 = vmatprep.subr.mxu0 %v430
    %1199 = vmatpush1.msra.mxu0 %v429
    %1200 = vmatprep.subr.mxu0 %v434
    %1201 = vmatpush1.msra.mxu0 %v433
    %1202 = vmatprep.subr.mxu0 %v438
    %1203 = vmatpush1.msra.mxu0 %v437
    %1204 = vmatprep.subr.mxu0 %v442
    %1205 = vmatpush1.msra.mxu0 %v441
    %1206 = vmatprep.subr.mxu0 %v446
    %1207 = vmatpush1.msra.mxu0 %v445
    %1208 = vmatprep.subr.mxu0 %v450
    %1209 = vmatpush1.msra.mxu0 %v449
    %1210 = vmatprep.subr.mxu0 %v454
    %1211 = vmatpush1.msra.mxu0 %v453
    %1212 = vmatprep.subr.mxu0 %v458
    %1213 = vmatpush1.msra.mxu0 %v457
    %1214 = vmatprep.subr.mxu0 %v462
    %1215 = vmatpush1.msra.mxu0 %v461
    %1216 = vmatprep.subr.mxu0 %v466
    %1217 = vmatpush1.msra.mxu0 %v465
    %1218 = vmatprep.subr.mxu0 %v470
    %1219 = vmatpush1.msra.mxu0 %v469
    %1220 = vmatprep.subr.mxu0 0.0
    %1221 = vmatpush1.msra.mxu0 0.0
    %1222 = vmatprep.subr.mxu0 0.0
    %1223 = vmatpush1.msra.mxu0 0.0
    %1224 = vmatprep.subr.mxu0 0.0
    %1225 = vmatpush1.msra.mxu0 0.0
    %1226 = vmatprep.subr.mxu0 0.0
    %1227 = vmatpush1.msra.mxu0 0.0
    %1228 = vmatprep.subr.mxu0 0.0
    %1229 = vmatpush1.msra.mxu0 0.0
    %1230 = vmatprep.subr.mxu0 0.0
    %1231 = vmatpush1.msra.mxu0 0.0
    %1232 = vmatprep.subr.mxu0 0.0
    %1233 = vmatpush1.msra.mxu0 0.0
    %1234 = vmatprep.subr.mxu0 0.0
    %1235 = vmatpush1.msra.mxu0 0.0
    %1236 = vmatprep.subr.mxu0 0.0
    %1237 = vmatpush1.msra.mxu0 0.0
    %1238 = vmatprep.subr.mxu0 0.0
    %1239 = vmatpush1.msra.mxu0 0.0
    %1240 = vmatprep.subr.mxu0 0.0
    %1241 = vmatpush1.msra.mxu0 0.0
    %1242 = vmatprep.subr.mxu0 0.0
    %1243 = vmatpush1.msra.mxu0 0.0
    %1244 = vmatprep.subr.mxu0 0.0
    %1245 = vmatpush1.msra.mxu0 0.0
    %1246 = vmatprep.subr.mxu0 0.0
    %1247 = vmatpush1.msra.mxu0 0.0
    %1248 = vmatprep.subr.mxu0 0.0
    %1249 = vmatpush1.msra.mxu0 0.0
    %1250 = vmatprep.subr.mxu0 0.0
    %1251 = vmatpush1.msra.mxu0 0.0
    %1252 = vmatprep.mubr.f32.mxu0 0.0
    %1253 = vmatmul.mubr.f32.gmra.mrb[0].mxu0 %v1180
    %v1254 = vpop.f32.mrb[0].mxu0
    %v1255 = vadd.f32 0.0, %v1254
    %v1256 = vpop.f32.mrb[0].mxu0
    %v1257 = vadd.f32 0.0, %v1256
    %1258 = vdwg.mxu0
    %1259 = vmatprep.subr.mxu0 %v412
    %1260 = vmatpush1.msra.mxu0 %v411
    %1261 = vmatprep.subr.mxu0 %v416
    %1262 = vmatpush1.msra.mxu0 %v415
    %1263 = vmatprep.subr.mxu0 %v420
    %1264 = vmatpush1.msra.mxu0 %v419
    %1265 = vmatprep.subr.mxu0 %v424
    %1266 = vmatpush1.msra.mxu0 %v423
    %1267 = vmatprep.subr.mxu0 %v428
    %1268 = vmatpush1.msra.mxu0 %v427
    %1269 = vmatprep.subr.mxu0 %v432
    %1270 = vmatpush1.msra.mxu0 %v431
    %1271 = vmatprep.subr.mxu0 %v436
    %1272 = vmatpush1.msra.mxu0 %v435
    %1273 = vmatprep.subr.mxu0 %v440
    %1274 = vmatpush1.msra.mxu0 %v439
    %1275 = vmatprep.subr.mxu0 %v444
    %1276 = vmatpush1.msra.mxu0 %v443
    %1277 = vmatprep.subr.mxu0 %v448
    %1278 = vmatpush1.msra.mxu0 %v447
    %1279 = vmatprep.subr.mxu0 %v452
    %1280 = vmatpush1.msra.mxu0 %v451
    %1281 = vmatprep.subr.mxu0 %v456
    %1282 = vmatpush1.msra.mxu0 %v455
    %1283 = vmatprep.subr.mxu0 %v460
    %1284 = vmatpush1.msra.mxu0 %v459
    %1285 = vmatprep.subr.mxu0 %v464
    %1286 = vmatpush1.msra.mxu0 %v463
    %1287 = vmatprep.subr.mxu0 %v468
    %1288 = vmatpush1.msra.mxu0 %v467
    %1289 = vmatprep.subr.mxu0 %v472
    %1290 = vmatpush1.msra.mxu0 %v471
    %1291 = vmatprep.subr.mxu0 0.0
    %1292 = vmatpush1.msra.mxu0 0.0
    %1293 = vmatprep.subr.mxu0 0.0
    %1294 = vmatpush1.msra.mxu0 0.0
    %1295 = vmatprep.subr.mxu0 0.0
    %1296 = vmatpush1.msra.mxu0 0.0
    %1297 = vmatprep.subr.mxu0 0.0
    %1298 = vmatpush1.msra.mxu0 0.0
    %1299 = vmatprep.subr.mxu0 0.0
    %1300 = vmatpush1.msra.mxu0 0.0
    %1301 = vmatprep.subr.mxu0 0.0
    %1302 = vmatpush1.msra.mxu0 0.0
    %1303 = vmatprep.subr.mxu0 0.0
    %1304 = vmatpush1.msra.mxu0 0.0
    %1305 = vmatprep.subr.mxu0 0.0
    %1306 = vmatpush1.msra.mxu0 0.0
    %1307 = vmatprep.subr.mxu0 0.0
    %1308 = vmatpush1.msra.mxu0 0.0
    %1309 = vmatprep.subr.mxu0 0.0
    %1310 = vmatpush1.msra.mxu0 0.0
    %1311 = vmatprep.subr.mxu0 0.0
    %1312 = vmatpush1.msra.mxu0 0.0
    %1313 = vmatprep.subr.mxu0 0.0
    %1314 = vmatpush1.msra.mxu0 0.0
    %1315 = vmatprep.subr.mxu0 0.0
    %1316 = vmatpush1.msra.mxu0 0.0
    %1317 = vmatprep.subr.mxu0 0.0
    %1318 = vmatpush1.msra.mxu0 0.0
    %1319 = vmatprep.subr.mxu0 0.0
    %1320 = vmatpush1.msra.mxu0 0.0
    %1321 = vmatprep.subr.mxu0 0.0
    %1322 = vmatpush1.msra.mxu0 0.0
    %1323 = vmatprep.mubr.f32.mxu0 0.0
    %1324 = vmatmul.mubr.f32.gmra.mrb[0].mxu0 %v1180
    %v1325 = vpop.f32.mrb[0].mxu0
    %v1326 = vadd.f32 0.0, %v1325
    %v1327 = vpop.f32.mrb[0].mxu0
    %v1328 = vadd.f32 0.0, %v1327
    %1329 = vdwg.mxu0
    %v1330 = vadd.f32 %v1184, %v1255
    %v1331 = vadd.f32 %v1185, %v1257
    %v1332 = vadd.f32 %v1186, %v1326
    %v1333 = vadd.f32 %v1187, %v1328
    %v1334 = vxor.u32 %v1330, 2147483648
    %v1335 = vmul.f32 %v1334, 1.442695
    %v1336 = vpow.pop %v1335
    %v1337 = vadd.f32 %v1336, 1.0
    %v1338 = vrcp.pop %v1337
    %v1339 = vmul.f32 1.0, %v1338
    %v1340 = vxor.u32 %v1331, 2147483648
    %v1341 = vmul.f32 %v1340, 1.442695
    %v1342 = vpow.pop %v1341
    %v1343 = vadd.f32 %v1342, 1.0
    %v1344 = vrcp.pop %v1343
    %v1345 = vmul.f32 1.0, %v1344
    %v1346 = vtanh.pop %v1332
    %v1347 = vxor.u32 %v1333, 2147483648
    %v1348 = vmul.f32 %v1347, 1.442695
    %v1349 = vpow.pop %v1348
    %v1350 = vadd.f32 %v1349, 1.0
    %v1351 = vrcp.pop %v1350
    %v1352 = vmul.f32 1.0, %v1351
    %v1353 = vmul.f32 %v1345, %v1178
    %v1354 = vmul.f32 %v1339, %v1346
    %v1355 = vadd.f32 %v1353, %v1354
    %v1356 = vtanh.pop %v1355
    %v1357 = vmul.f32 %v1352, %v1356
    %s1358 = smul.u32 5, 4
    %s1359 = smul.addr %s1358, 8
    %s1360 = scalar_lea.vmem [#allocation2], %s1359
    %v1361 = vld [vmem:[%s1360] sm:$0xff]
    %v1362 = vld [vmem:[%s1360 + $0x8] sm:$0xff]
    %v1363 = vld [vmem:[%s1360 + $0x10] sm:$0xff]
    %v1364 = vld [vmem:[%s1360 + $0x18] sm:$0xff]
    %1365 = vmatprep.subr.mxu0 %v410
    %1366 = vmatpush1.msra.mxu0 %v409
    %1367 = vmatprep.subr.mxu0 %v414
    %1368 = vmatpush1.msra.mxu0 %v413
    %1369 = vmatprep.subr.mxu0 %v418
    %1370 = vmatpush1.msra.mxu0 %v417
    %1371 = vmatprep.subr.mxu0 %v422
    %1372 = vmatpush1.msra.mxu0 %v421
    %1373 = vmatprep.subr.mxu0 %v426
    %1374 = vmatpush1.msra.mxu0 %v425
    %1375 = vmatprep.subr.mxu0 %v430
    %1376 = vmatpush1.msra.mxu0 %v429
    %1377 = vmatprep.subr.mxu0 %v434
    %1378 = vmatpush1.msra.mxu0 %v433
    %1379 = vmatprep.subr.mxu0 %v438
    %1380 = vmatpush1.msra.mxu0 %v437
    %1381 = vmatprep.subr.mxu0 %v442
    %1382 = vmatpush1.msra.mxu0 %v441
    %1383 = vmatprep.subr.mxu0 %v446
    %1384 = vmatpush1.msra.mxu0 %v445
    %1385 = vmatprep.subr.mxu0 %v450
    %1386 = vmatpush1.msra.mxu0 %v449
    %1387 = vmatprep.subr.mxu0 %v454
    %1388 = vmatpush1.msra.mxu0 %v453
    %1389 = vmatprep.subr.mxu0 %v458
    %1390 = vmatpush1.msra.mxu0 %v457
    %1391 = vmatprep.subr.mxu0 %v462
    %1392 = vmatpush1.msra.mxu0 %v461
    %1393 = vmatprep.subr.mxu0 %v466
    %1394 = vmatpush1.msra.mxu0 %v465
    %1395 = vmatprep.subr.mxu0 %v470
    %1396 = vmatpush1.msra.mxu0 %v469
    %1397 = vmatprep.subr.mxu0 0.0
    %1398 = vmatpush1.msra.mxu0 0.0
    %1399 = vmatprep.subr.mxu0 0.0
    %1400 = vmatpush1.msra.mxu0 0.0
    %1401 = vmatprep.subr.mxu0 0.0
    %1402 = vmatpush1.msra.mxu0 0.0
    %1403 = vmatprep.subr.mxu0 0.0
    %1404 = vmatpush1.msra.mxu0 0.0
    %1405 = vmatprep.subr.mxu0 0.0
    %1406 = vmatpush1.msra.mxu0 0.0
    %1407 = vmatprep.subr.mxu0 0.0
    %1408 = vmatpush1.msra.mxu0 0.0
    %1409 = vmatprep.subr.mxu0 0.0
    %1410 = vmatpush1.msra.mxu0 0.0
    %1411 = vmatprep.subr.mxu0 0.0
    %1412 = vmatpush1.msra.mxu0 0.0
    %1413 = vmatprep.subr.mxu0 0.0
    %1414 = vmatpush1.msra.mxu0 0.0
    %1415 = vmatprep.subr.mxu0 0.0
    %1416 = vmatpush1.msra.mxu0 0.0
    %1417 = vmatprep.subr.mxu0 0.0
    %1418 = vmatpush1.msra.mxu0 0.0
    %1419 = vmatprep.subr.mxu0 0.0
    %1420 = vmatpush1.msra.mxu0 0.0
    %1421 = vmatprep.subr.mxu0 0.0
    %1422 = vmatpush1.msra.mxu0 0.0
    %1423 = vmatprep.subr.mxu0 0.0
    %1424 = vmatpush1.msra.mxu0 0.0
    %1425 = vmatprep.subr.mxu0 0.0
    %1426 = vmatpush1.msra.mxu0 0.0
    %1427 = vmatprep.subr.mxu0 0.0
    %1428 = vmatpush1.msra.mxu0 0.0
    %1429 = vmatprep.mubr.f32.mxu0 0.0
    %1430 = vmatmul.mubr.f32.gmra.mrb[0].mxu0 %v1357
    %v1431 = vpop.f32.mrb[0].mxu0
    %v1432 = vadd.f32 0.0, %v1431
    %v1433 = vpop.f32.mrb[0].mxu0
    %v1434 = vadd.f32 0.0, %v1433
    %1435 = vdwg.mxu0
    %1436 = vmatprep.subr.mxu0 %v412
    %1437 = vmatpush1.msra.mxu0 %v411
    %1438 = vmatprep.subr.mxu0 %v416
    %1439 = vmatpush1.msra.mxu0 %v415
    %1440 = vmatprep.subr.mxu0 %v420
    %1441 = vmatpush1.msra.mxu0 %v419
    %1442 = vmatprep.subr.mxu0 %v424
    %1443 = vmatpush1.msra.mxu0 %v423
    %1444 = vmatprep.subr.mxu0 %v428
    %1445 = vmatpush1.msra.mxu0 %v427
    %1446 = vmatprep.subr.mxu0 %v432
    %1447 = vmatpush1.msra.mxu0 %v431
    %1448 = vmatprep.subr.mxu0 %v436
    %1449 = vmatpush1.msra.mxu0 %v435
    %1450 = vmatprep.subr.mxu0 %v440
    %1451 = vmatpush1.msra.mxu0 %v439
    %1452 = vmatprep.subr.mxu0 %v444
    %1453 = vmatpush1.msra.mxu0 %v443
    %1454 = vmatprep.subr.mxu0 %v448
    %1455 = vmatpush1.msra.mxu0 %v447
    %1456 = vmatprep.subr.mxu0 %v452
    %1457 = vmatpush1.msra.mxu0 %v451
    %1458 = vmatprep.subr.mxu0 %v456
    %1459 = vmatpush1.msra.mxu0 %v455
    %1460 = vmatprep.subr.mxu0 %v460
    %1461 = vmatpush1.msra.mxu0 %v459
    %1462 = vmatprep.subr.mxu0 %v464
    %1463 = vmatpush1.msra.mxu0 %v463
    %1464 = vmatprep.subr.mxu0 %v468
    %1465 = vmatpush1.msra.mxu0 %v467
    %1466 = vmatprep.subr.mxu0 %v472
    %1467 = vmatpush1.msra.mxu0 %v471
    %1468 = vmatprep.subr.mxu0 0.0
    %1469 = vmatpush1.msra.mxu0 0.0
    %1470 = vmatprep.subr.mxu0 0.0
    %1471 = vmatpush1.msra.mxu0 0.0
    %1472 = vmatprep.subr.mxu0 0.0
    %1473 = vmatpush1.msra.mxu0 0.0
    %1474 = vmatprep.subr.mxu0 0.0
    %1475 = vmatpush1.msra.mxu0 0.0
    %1476 = vmatprep.subr.mxu0 0.0
    %1477 = vmatpush1.msra.mxu0 0.0
    %1478 = vmatprep.subr.mxu0 0.0
    %1479 = vmatpush1.msra.mxu0 0.0
    %1480 = vmatprep.subr.mxu0 0.0
    %1481 = vmatpush1.msra.mxu0 0.0
    %1482 = vmatprep.subr.mxu0 0.0
    %1483 = vmatpush1.msra.mxu0 0.0
    %1484 = vmatprep.subr.mxu0 0.0
    %1485 = vmatpush1.msra.mxu0 0.0
    %1486 = vmatprep.subr.mxu0 0.0
    %1487 = vmatpush1.msra.mxu0 0.0
    %1488 = vmatprep.subr.mxu0 0.0
    %1489 = vmatpush1.msra.mxu0 0.0
    %1490 = vmatprep.subr.mxu0 0.0
    %1491 = vmatpush1.msra.mxu0 0.0
    %1492 = vmatprep.subr.mxu0 0.0
    %1493 = vmatpush1.msra.mxu0 0.0
    %1494 = vmatprep.subr.mxu0 0.0
    %1495 = vmatpush1.msra.mxu0 0.0
    %1496 = vmatprep.subr.mxu0 0.0
    %1497 = vmatpush1.msra.mxu0 0.0
    %1498 = vmatprep.subr.mxu0 0.0
    %1499 = vmatpush1.msra.mxu0 0.0
    %1500 = vmatprep.mubr.f32.mxu0 0.0
    %1501 = vmatmul.mubr.f32.gmra.mrb[0].mxu0 %v1357
    %v1502 = vpop.f32.mrb[0].mxu0
    %v1503 = vadd.f32 0.0, %v1502
    %v1504 = vpop.f32.mrb[0].mxu0
    %v1505 = vadd.f32 0.0, %v1504
    %1506 = vdwg.mxu0
    %v1507 = vadd.f32 %v1361, %v1432
    %v1508 = vadd.f32 %v1362, %v1434
    %v1509 = vadd.f32 %v1363, %v1503
    %v1510 = vadd.f32 %v1364, %v1505
    %v1511 = vxor.u32 %v1507, 2147483648
    %v1512 = vmul.f32 %v1511, 1.442695
    %v1513 = vpow.pop %v1512
    %v1514 = vadd.f32 %v1513, 1.0
    %v1515 = vrcp.pop %v1514
    %v1516 = vmul.f32 1.0, %v1515
    %v1517 = vxor.u32 %v1508, 2147483648
    %v1518 = vmul.f32 %v1517, 1.442695
    %v1519 = vpow.pop %v1518
    %v1520 = vadd.f32 %v1519, 1.0
    %v1521 = vrcp.pop %v1520
    %v1522 = vmul.f32 1.0, %v1521
    %v1523 = vtanh.pop %v1509
    %v1524 = vxor.u32 %v1510, 2147483648
    %v1525 = vmul.f32 %v1524, 1.442695
    %v1526 = vpow.pop %v1525
    %v1527 = vadd.f32 %v1526, 1.0
    %v1528 = vrcp.pop %v1527
    %v1529 = vmul.f32 1.0, %v1528
    %v1530 = vmul.f32 %v1522, %v1355
    %v1531 = vmul.f32 %v1516, %v1523
    %v1532 = vadd.f32 %v1530, %v1531
    %v1533 = vtanh.pop %v1532
    %v1534 = vmul.f32 %v1529, %v1533
    %s1535 = smul.u32 6, 4
    %s1536 = smul.addr %s1535, 8
    %s1537 = scalar_lea.vmem [#allocation2], %s1536
    %v1538 = vld [vmem:[%s1537] sm:$0xff]
    %v1539 = vld [vmem:[%s1537 + $0x8] sm:$0xff]
    %v1540 = vld [vmem:[%s1537 + $0x10] sm:$0xff]
    %v1541 = vld [vmem:[%s1537 + $0x18] sm:$0xff]
    %1542 = vmatprep.subr.mxu0 %v410
    %1543 = vmatpush1.msra.mxu0 %v409
    %1544 = vmatprep.subr.mxu0 %v414
    %1545 = vmatpush1.msra.mxu0 %v413
    %1546 = vmatprep.subr.mxu0 %v418
    %1547 = vmatpush1.msra.mxu0 %v417
    %1548 = vmatprep.subr.mxu0 %v422
    %1549 = vmatpush1.msra.mxu0 %v421
    %1550 = vmatprep.subr.mxu0 %v426
    %1551 = vmatpush1.msra.mxu0 %v425
    %1552 = vmatprep.subr.mxu0 %v430
    %1553 = vmatpush1.msra.mxu0 %v429
    %1554 = vmatprep.subr.mxu0 %v434
    %1555 = vmatpush1.msra.mxu0 %v433
    %1556 = vmatprep.subr.mxu0 %v438
    %1557 = vmatpush1.msra.mxu0 %v437
    %1558 = vmatprep.subr.mxu0 %v442
    %1559 = vmatpush1.msra.mxu0 %v441
    %1560 = vmatprep.subr.mxu0 %v446
    %1561 = vmatpush1.msra.mxu0 %v445
    %1562 = vmatprep.subr.mxu0 %v450
    %1563 = vmatpush1.msra.mxu0 %v449
    %1564 = vmatprep.subr.mxu0 %v454
    %1565 = vmatpush1.msra.mxu0 %v453
    %1566 = vmatprep.subr.mxu0 %v458
    %1567 = vmatpush1.msra.mxu0 %v457
    %1568 = vmatprep.subr.mxu0 %v462
    %1569 = vmatpush1.msra.mxu0 %v461
    %1570 = vmatprep.subr.mxu0 %v466
    %1571 = vmatpush1.msra.mxu0 %v465
    %1572 = vmatprep.subr.mxu0 %v470
    %1573 = vmatpush1.msra.mxu0 %v469
    %1574 = vmatprep.subr.mxu0 0.0
    %1575 = vmatpush1.msra.mxu0 0.0
    %1576 = vmatprep.subr.mxu0 0.0
    %1577 = vmatpush1.msra.mxu0 0.0
    %1578 = vmatprep.subr.mxu0 0.0
    %1579 = vmatpush1.msra.mxu0 0.0
    %1580 = vmatprep.subr.mxu0 0.0
    %1581 = vmatpush1.msra.mxu0 0.0
    %1582 = vmatprep.subr.mxu0 0.0
    %1583 = vmatpush1.msra.mxu0 0.0
    %1584 = vmatprep.subr.mxu0 0.0
    %1585 = vmatpush1.msra.mxu0 0.0
    %1586 = vmatprep.subr.mxu0 0.0
    %1587 = vmatpush1.msra.mxu0 0.0
    %1588 = vmatprep.subr.mxu0 0.0
    %1589 = vmatpush1.msra.mxu0 0.0
    %1590 = vmatprep.subr.mxu0 0.0
    %1591 = vmatpush1.msra.mxu0 0.0
    %1592 = vmatprep.subr.mxu0 0.0
    %1593 = vmatpush1.msra.mxu0 0.0
    %1594 = vmatprep.subr.mxu0 0.0
    %1595 = vmatpush1.msra.mxu0 0.0
    %1596 = vmatprep.subr.mxu0 0.0
    %1597 = vmatpush1.msra.mxu0 0.0
    %1598 = vmatprep.subr.mxu0 0.0
    %1599 = vmatpush1.msra.mxu0 0.0
    %1600 = vmatprep.subr.mxu0 0.0
    %1601 = vmatpush1.msra.mxu0 0.0
    %1602 = vmatprep.subr.mxu0 0.0
    %1603 = vmatpush1.msra.mxu0 0.0
    %1604 = vmatprep.subr.mxu0 0.0
    %1605 = vmatpush1.msra.mxu0 0.0
    %1606 = vmatprep.mubr.f32.mxu0 0.0
    %1607 = vmatmul.mubr.f32.gmra.mrb[0].mxu0 %v1534
    %v1608 = vpop.f32.mrb[0].mxu0
    %v1609 = vadd.f32 0.0, %v1608
    %v1610 = vpop.f32.mrb[0].mxu0
    %v1611 = vadd.f32 0.0, %v1610
    %1612 = vdwg.mxu0
    %1613 = vmatprep.subr.mxu0 %v412
    %1614 = vmatpush1.msra.mxu0 %v411
    %1615 = vmatprep.subr.mxu0 %v416
    %1616 = vmatpush1.msra.mxu0 %v415
    %1617 = vmatprep.subr.mxu0 %v420
    %1618 = vmatpush1.msra.mxu0 %v419
    %1619 = vmatprep.subr.mxu0 %v424
    %1620 = vmatpush1.msra.mxu0 %v423
    %1621 = vmatprep.subr.mxu0 %v428
    %1622 = vmatpush1.msra.mxu0 %v427
    %1623 = vmatprep.subr.mxu0 %v432
    %1624 = vmatpush1.msra.mxu0 %v431
    %1625 = vmatprep.subr.mxu0 %v436
    %1626 = vmatpush1.msra.mxu0 %v435
    %1627 = vmatprep.subr.mxu0 %v440
    %1628 = vmatpush1.msra.mxu0 %v439
    %1629 = vmatprep.subr.mxu0 %v444
    %1630 = vmatpush1.msra.mxu0 %v443
    %1631 = vmatprep.subr.mxu0 %v448
    %1632 = vmatpush1.msra.mxu0 %v447
    %1633 = vmatprep.subr.mxu0 %v452
    %1634 = vmatpush1.msra.mxu0 %v451
    %1635 = vmatprep.subr.mxu0 %v456
    %1636 = vmatpush1.msra.mxu0 %v455
    %1637 = vmatprep.subr.mxu0 %v460
    %1638 = vmatpush1.msra.mxu0 %v459
    %1639 = vmatprep.subr.mxu0 %v464
    %1640 = vmatpush1.msra.mxu0 %v463
    %1641 = vmatprep.subr.mxu0 %v468
    %1642 = vmatpush1.msra.mxu0 %v467
    %1643 = vmatprep.subr.mxu0 %v472
    %1644 = vmatpush1.msra.mxu0 %v471
    %1645 = vmatprep.subr.mxu0 0.0
    %1646 = vmatpush1.msra.mxu0 0.0
    %1647 = vmatprep.subr.mxu0 0.0
    %1648 = vmatpush1.msra.mxu0 0.0
    %1649 = vmatprep.subr.mxu0 0.0
    %1650 = vmatpush1.msra.mxu0 0.0
    %1651 = vmatprep.subr.mxu0 0.0
    %1652 = vmatpush1.msra.mxu0 0.0
    %1653 = vmatprep.subr.mxu0 0.0
    %1654 = vmatpush1.msra.mxu0 0.0
    %1655 = vmatprep.subr.mxu0 0.0
    %1656 = vmatpush1.msra.mxu0 0.0
    %1657 = vmatprep.subr.mxu0 0.0
    %1658 = vmatpush1.msra.mxu0 0.0
    %1659 = vmatprep.subr.mxu0 0.0
    %1660 = vmatpush1.msra.mxu0 0.0
    %1661 = vmatprep.subr.mxu0 0.0
    %1662 = vmatpush1.msra.mxu0 0.0
    %1663 = vmatprep.subr.mxu0 0.0
    %1664 = vmatpush1.msra.mxu0 0.0
    %1665 = vmatprep.subr.mxu0 0.0
    %1666 = vmatpush1.msra.mxu0 0.0
    %1667 = vmatprep.subr.mxu0 0.0
    %1668 = vmatpush1.msra.mxu0 0.0
    %1669 = vmatprep.subr.mxu0 0.0
    %1670 = vmatpush1.msra.mxu0 0.0
    %1671 = vmatprep.subr.mxu0 0.0
    %1672 = vmatpush1.msra.mxu0 0.0
    %1673 = vmatprep.subr.mxu0 0.0
    %1674 = vmatpush1.msra.mxu0 0.0
    %1675 = vmatprep.subr.mxu0 0.0
    %1676 = vmatpush1.msra.mxu0 0.0
    %1677 = vmatprep.mubr.f32.mxu0 0.0
    %1678 = vmatmul.mubr.f32.gmra.mrb[0].mxu0 %v1534
    %v1679 = vpop.f32.mrb[0].mxu0
    %v1680 = vadd.f32 0.0, %v1679
    %v1681 = vpop.f32.mrb[0].mxu0
    %v1682 = vadd.f32 0.0, %v1681
    %1683 = vdwg.mxu0
    %v1684 = vadd.f32 %v1538, %v1609
    %v1685 = vadd.f32 %v1539, %v1611
    %v1686 = vadd.f32 %v1540, %v1680
    %v1687 = vadd.f32 %v1541, %v1682
    %v1688 = vxor.u32 %v1684, 2147483648
    %v1689 = vmul.f32 %v1688, 1.442695
    %v1690 = vpow.pop %v1689
    %v1691 = vadd.f32 %v1690, 1.0
    %v1692 = vrcp.pop %v1691
    %v1693 = vmul.f32 1.0, %v1692
    %v1694 = vxor.u32 %v1685, 2147483648
    %v1695 = vmul.f32 %v1694, 1.442695
    %v1696 = vpow.pop %v1695
    %v1697 = vadd.f32 %v1696, 1.0
    %v1698 = vrcp.pop %v1697
    %v1699 = vmul.f32 1.0, %v1698
    %v1700 = vtanh.pop %v1686
    %v1701 = vxor.u32 %v1687, 2147483648
    %v1702 = vmul.f32 %v1701, 1.442695
    %v1703 = vpow.pop %v1702
    %v1704 = vadd.f32 %v1703, 1.0
    %v1705 = vrcp.pop %v1704
    %v1706 = vmul.f32 1.0, %v1705
    %v1707 = vmul.f32 %v1699, %v1532
    %v1708 = vmul.f32 %v1693, %v1700
    %v1709 = vadd.f32 %v1707, %v1708
    %v1710 = vtanh.pop %v1709
    %v1711 = vmul.f32 %v1706, %v1710
    %s1712 = smul.u32 7, 4
    %s1713 = smul.addr %s1712, 8
    %s1714 = scalar_lea.vmem [#allocation2], %s1713
    %v1715 = vld [vmem:[%s1714] sm:$0xff]
    %v1716 = vld [vmem:[%s1714 + $0x8] sm:$0xff]
    %v1717 = vld [vmem:[%s1714 + $0x10] sm:$0xff]
    %v1718 = vld [vmem:[%s1714 + $0x18] sm:$0xff]
    %1719 = vmatprep.subr.mxu0 %v410
    %1720 = vmatpush1.msra.mxu0 %v409
    %1721 = vmatprep.subr.mxu0 %v414
    %1722 = vmatpush1.msra.mxu0 %v413
    %1723 = vmatprep.subr.mxu0 %v418
    %1724 = vmatpush1.msra.mxu0 %v417
    %1725 = vmatprep.subr.mxu0 %v422
    %1726 = vmatpush1.msra.mxu0 %v421
    %1727 = vmatprep.subr.mxu0 %v426
    %1728 = vmatpush1.msra.mxu0 %v425
    %1729 = vmatprep.subr.mxu0 %v430
    %1730 = vmatpush1.msra.mxu0 %v429
    %1731 = vmatprep.subr.mxu0 %v434
    %1732 = vmatpush1.msra.mxu0 %v433
    %1733 = vmatprep.subr.mxu0 %v438
    %1734 = vmatpush1.msra.mxu0 %v437
    %1735 = vmatprep.subr.mxu0 %v442
    %1736 = vmatpush1.msra.mxu0 %v441
    %1737 = vmatprep.subr.mxu0 %v446
    %1738 = vmatpush1.msra.mxu0 %v445
    %1739 = vmatprep.subr.mxu0 %v450
    %1740 = vmatpush1.msra.mxu0 %v449
    %1741 = vmatprep.subr.mxu0 %v454
    %1742 = vmatpush1.msra.mxu0 %v453
    %1743 = vmatprep.subr.mxu0 %v458
    %1744 = vmatpush1.msra.mxu0 %v457
    %1745 = vmatprep.subr.mxu0 %v462
    %1746 = vmatpush1.msra.mxu0 %v461
    %1747 = vmatprep.subr.mxu0 %v466
    %1748 = vmatpush1.msra.mxu0 %v465
    %1749 = vmatprep.subr.mxu0 %v470
    %1750 = vmatpush1.msra.mxu0 %v469
    %1751 = vmatprep.subr.mxu0 0.0
    %1752 = vmatpush1.msra.mxu0 0.0
    %1753 = vmatprep.subr.mxu0 0.0
    %1754 = vmatpush1.msra.mxu0 0.0
    %1755 = vmatprep.subr.mxu0 0.0
    %1756 = vmatpush1.msra.mxu0 0.0
    %1757 = vmatprep.subr.mxu0 0.0
    %1758 = vmatpush1.msra.mxu0 0.0
    %1759 = vmatprep.subr.mxu0 0.0
    %1760 = vmatpush1.msra.mxu0 0.0
    %1761 = vmatprep.subr.mxu0 0.0
    %1762 = vmatpush1.msra.mxu0 0.0
    %1763 = vmatprep.subr.mxu0 0.0
    %1764 = vmatpush1.msra.mxu0 0.0
    %1765 = vmatprep.subr.mxu0 0.0
    %1766 = vmatpush1.msra.mxu0 0.0
    %1767 = vmatprep.subr.mxu0 0.0
    %1768 = vmatpush1.msra.mxu0 0.0
    %1769 = vmatprep.subr.mxu0 0.0
    %1770 = vmatpush1.msra.mxu0 0.0
    %1771 = vmatprep.subr.mxu0 0.0
    %1772 = vmatpush1.msra.mxu0 0.0
    %1773 = vmatprep.subr.mxu0 0.0
    %1774 = vmatpush1.msra.mxu0 0.0
    %1775 = vmatprep.subr.mxu0 0.0
    %1776 = vmatpush1.msra.mxu0 0.0
    %1777 = vmatprep.subr.mxu0 0.0
    %1778 = vmatpush1.msra.mxu0 0.0
    %1779 = vmatprep.subr.mxu0 0.0
    %1780 = vmatpush1.msra.mxu0 0.0
    %1781 = vmatprep.subr.mxu0 0.0
    %1782 = vmatpush1.msra.mxu0 0.0
    %1783 = vmatprep.mubr.f32.mxu0 0.0
    %1784 = vmatmul.mubr.f32.gmra.mrb[0].mxu0 %v1711
    %v1785 = vpop.f32.mrb[0].mxu0
    %v1786 = vadd.f32 0.0, %v1785
    %v1787 = vpop.f32.mrb[0].mxu0
    %v1788 = vadd.f32 0.0, %v1787
    %1789 = vdwg.mxu0
    %1790 = vmatprep.subr.mxu0 %v412
    %1791 = vmatpush1.msra.mxu0 %v411
    %1792 = vmatprep.subr.mxu0 %v416
    %1793 = vmatpush1.msra.mxu0 %v415
    %1794 = vmatprep.subr.mxu0 %v420
    %1795 = vmatpush1.msra.mxu0 %v419
    %1796 = vmatprep.subr.mxu0 %v424
    %1797 = vmatpush1.msra.mxu0 %v423
    %1798 = vmatprep.subr.mxu0 %v428
    %1799 = vmatpush1.msra.mxu0 %v427
    %1800 = vmatprep.subr.mxu0 %v432
    %1801 = vmatpush1.msra.mxu0 %v431
    %1802 = vmatprep.subr.mxu0 %v436
    %1803 = vmatpush1.msra.mxu0 %v435
    %1804 = vmatprep.subr.mxu0 %v440
    %1805 = vmatpush1.msra.mxu0 %v439
    %1806 = vmatprep.subr.mxu0 %v444
    %1807 = vmatpush1.msra.mxu0 %v443
    %1808 = vmatprep.subr.mxu0 %v448
    %1809 = vmatpush1.msra.mxu0 %v447
    %1810 = vmatprep.subr.mxu0 %v452
    %1811 = vmatpush1.msra.mxu0 %v451
    %1812 = vmatprep.subr.mxu0 %v456
    %1813 = vmatpush1.msra.mxu0 %v455
    %1814 = vmatprep.subr.mxu0 %v460
    %1815 = vmatpush1.msra.mxu0 %v459
    %1816 = vmatprep.subr.mxu0 %v464
    %1817 = vmatpush1.msra.mxu0 %v463
    %1818 = vmatprep.subr.mxu0 %v468
    %1819 = vmatpush1.msra.mxu0 %v467
    %1820 = vmatprep.subr.mxu0 %v472
    %1821 = vmatpush1.msra.mxu0 %v471
    %1822 = vmatprep.subr.mxu0 0.0
    %1823 = vmatpush1.msra.mxu0 0.0
    %1824 = vmatprep.subr.mxu0 0.0
    %1825 = vmatpush1.msra.mxu0 0.0
    %1826 = vmatprep.subr.mxu0 0.0
    %1827 = vmatpush1.msra.mxu0 0.0
    %1828 = vmatprep.subr.mxu0 0.0
    %1829 = vmatpush1.msra.mxu0 0.0
    %1830 = vmatprep.subr.mxu0 0.0
    %1831 = vmatpush1.msra.mxu0 0.0
    %1832 = vmatprep.subr.mxu0 0.0
    %1833 = vmatpush1.msra.mxu0 0.0
    %1834 = vmatprep.subr.mxu0 0.0
    %1835 = vmatpush1.msra.mxu0 0.0
    %1836 = vmatprep.subr.mxu0 0.0
    %1837 = vmatpush1.msra.mxu0 0.0
    %1838 = vmatprep.subr.mxu0 0.0
    %1839 = vmatpush1.msra.mxu0 0.0
    %1840 = vmatprep.subr.mxu0 0.0
    %1841 = vmatpush1.msra.mxu0 0.0
    %1842 = vmatprep.subr.mxu0 0.0
    %1843 = vmatpush1.msra.mxu0 0.0
    %1844 = vmatprep.subr.mxu0 0.0
    %1845 = vmatpush1.msra.mxu0 0.0
    %1846 = vmatprep.subr.mxu0 0.0
    %1847 = vmatpush1.msra.mxu0 0.0
    %1848 = vmatprep.subr.mxu0 0.0
    %1849 = vmatpush1.msra.mxu0 0.0
    %1850 = vmatprep.subr.mxu0 0.0
    %1851 = vmatpush1.msra.mxu0 0.0
    %1852 = vmatprep.subr.mxu0 0.0
    %1853 = vmatpush1.msra.mxu0 0.0
    %1854 = vmatprep.mubr.f32.mxu0 0.0
    %1855 = vmatmul.mubr.f32.gmra.mrb[0].mxu0 %v1711
    %v1856 = vpop.f32.mrb[0].mxu0
    %v1857 = vadd.f32 0.0, %v1856
    %v1858 = vpop.f32.mrb[0].mxu0
    %v1859 = vadd.f32 0.0, %v1858
    %1860 = vdwg.mxu0
    %v1861 = vadd.f32 %v1715, %v1786
    %v1862 = vadd.f32 %v1716, %v1788
    %v1863 = vadd.f32 %v1717, %v1857
    %v1864 = vadd.f32 %v1718, %v1859
    %v1865 = vxor.u32 %v1861, 2147483648
    %v1866 = vmul.f32 %v1865, 1.442695
    %v1867 = vpow.pop %v1866
    %v1868 = vadd.f32 %v1867, 1.0
    %v1869 = vrcp.pop %v1868
    %v1870 = vmul.f32 1.0, %v1869
    %v1871 = vxor.u32 %v1862, 2147483648
    %v1872 = vmul.f32 %v1871, 1.442695
    %v1873 = vpow.pop %v1872
    %v1874 = vadd.f32 %v1873, 1.0
    %v1875 = vrcp.pop %v1874
    %v1876 = vmul.f32 1.0, %v1875
    %v1877 = vtanh.pop %v1863
    %v1878 = vxor.u32 %v1864, 2147483648
    %v1879 = vmul.f32 %v1878, 1.442695
    %v1880 = vpow.pop %v1879
    %v1881 = vadd.f32 %v1880, 1.0
    %v1882 = vrcp.pop %v1881
    %v1883 = vmul.f32 1.0, %v1882
    %v1884 = vmul.f32 %v1876, %v1709
    %v1885 = vmul.f32 %v1870, %v1877
    %v1886 = vadd.f32 %v1884, %v1885
    %v1887 = vtanh.pop %v1886
    %v1888 = vmul.f32 %v1883, %v1887
    %v1889 = vld [vmem:[%s5] sm:$0xff]
    %v1890 = vld [vmem:[%s5 + $0x8] sm:$0xff]
    %v1891 = vld [vmem:[%s5 + $0x10] sm:$0xff]
    %v1892 = vld [vmem:[%s5 + $0x18] sm:$0xff]
    %v1893 = vld [vmem:[%s5 + $0x20] sm:$0xff]
    %v1894 = vld [vmem:[%s5 + $0x28] sm:$0xff]
    %v1895 = vld [vmem:[%s5 + $0x30] sm:$0xff]
    %v1896 = vld [vmem:[%s5 + $0x38] sm:$0xff]
    %v1897 = vld [vmem:[%s5 + $0x40] sm:$0xff]
    %v1898 = vld [vmem:[%s5 + $0x48] sm:$0xff]
    %v1899 = vld [vmem:[%s5 + $0x50] sm:$0xff]
    %v1900 = vld [vmem:[%s5 + $0x58] sm:$0xff]
    %v1901 = vld [vmem:[%s5 + $0x60] sm:$0xff]
    %v1902 = vld [vmem:[%s5 + $0x68] sm:$0xff]
    %v1903 = vld [vmem:[%s5 + $0x70] sm:$0xff]
    %v1904 = vld [vmem:[%s5 + $0x78] sm:$0xff]
    %v1905 = vld [vmem:[%s1] sm:$0xff]
    %v1906 = vld [vmem:[%s6] sm:$0xff]
    %v1907 = vld [vmem:[%s6 + $0x8] sm:$0xff]
    %v1908 = vld [vmem:[%s6 + $0x10] sm:$0xff]
    %v1909 = vld [vmem:[%s6 + $0x18] sm:$0xff]
    %v1910 = vld [vmem:[%s6 + $0x20] sm:$0xff]
    %v1911 = vld [vmem:[%s6 + $0x28] sm:$0xff]
    %v1912 = vld [vmem:[%s6 + $0x30] sm:$0xff]
    %v1913 = vld [vmem:[%s6 + $0x38] sm:$0xff]
    %v1914 = vld [vmem:[%s6 + $0x40] sm:$0xff]
    %v1915 = vld [vmem:[%s6 + $0x48] sm:$0xff]
    %v1916 = vld [vmem:[%s6 + $0x50] sm:$0xff]
    %v1917 = vld [vmem:[%s6 + $0x58] sm:$0xff]
    %v1918 = vld [vmem:[%s6 + $0x60] sm:$0xff]
    %v1919 = vld [vmem:[%s6 + $0x68] sm:$0xff]
    %v1920 = vld [vmem:[%s6 + $0x70] sm:$0xff]
    %v1921 = vld [vmem:[%s6 + $0x78] sm:$0xff]
    %1922 = vmatprep.subr.mxu0 0.0
    %1923 = vmatpush1.msra.mxu0 %v1906
    %1924 = vmatprep.subr.mxu0 0.0
    %1925 = vmatpush1.msra.mxu0 %v1907
    %1926 = vmatprep.subr.mxu0 0.0
    %1927 = vmatpush1.msra.mxu0 %v1908
    %1928 = vmatprep.subr.mxu0 0.0
    %1929 = vmatpush1.msra.mxu0 %v1909
    %1930 = vmatprep.subr.mxu0 0.0
    %1931 = vmatpush1.msra.mxu0 %v1910
    %1932 = vmatprep.subr.mxu0 0.0
    %1933 = vmatpush1.msra.mxu0 %v1911
    %1934 = vmatprep.subr.mxu0 0.0
    %1935 = vmatpush1.msra.mxu0 %v1912
    %1936 = vmatprep.subr.mxu0 0.0
    %1937 = vmatpush1.msra.mxu0 %v1913
    %1938 = vmatprep.subr.mxu0 0.0
    %1939 = vmatpush1.msra.mxu0 %v1914
    %1940 = vmatprep.subr.mxu0 0.0
    %1941 = vmatpush1.msra.mxu0 %v1915
    %1942 = vmatprep.subr.mxu0 0.0
    %1943 = vmatpush1.msra.mxu0 %v1916
    %1944 = vmatprep.subr.mxu0 0.0
    %1945 = vmatpush1.msra.mxu0 %v1917
    %1946 = vmatprep.subr.mxu0 0.0
    %1947 = vmatpush1.msra.mxu0 %v1918
    %1948 = vmatprep.subr.mxu0 0.0
    %1949 = vmatpush1.msra.mxu0 %v1919
    %1950 = vmatprep.subr.mxu0 0.0
    %1951 = vmatpush1.msra.mxu0 %v1920
    %1952 = vmatprep.subr.mxu0 0.0
    %1953 = vmatpush1.msra.mxu0 %v1921
    %1954 = vmatprep.subr.mxu0 0.0
    %1955 = vmatpush1.msra.mxu0 0.0
    %1956 = vmatprep.subr.mxu0 0.0
    %1957 = vmatpush1.msra.mxu0 0.0
    %1958 = vmatprep.subr.mxu0 0.0
    %1959 = vmatpush1.msra.mxu0 0.0
    %1960 = vmatprep.subr.mxu0 0.0
    %1961 = vmatpush1.msra.mxu0 0.0
    %1962 = vmatprep.subr.mxu0 0.0
    %1963 = vmatpush1.msra.mxu0 0.0
    %1964 = vmatprep.subr.mxu0 0.0
    %1965 = vmatpush1.msra.mxu0 0.0
    %1966 = vmatprep.subr.mxu0 0.0
    %1967 = vmatpush1.msra.mxu0 0.0
    %1968 = vmatprep.subr.mxu0 0.0
    %1969 = vmatpush1.msra.mxu0 0.0
    %1970 = vmatprep.subr.mxu0 0.0
    %1971 = vmatpush1.msra.mxu0 0.0
    %1972 = vmatprep.subr.mxu0 0.0
    %1973 = vmatpush1.msra.mxu0 0.0
    %1974 = vmatprep.subr.mxu0 0.0
    %1975 = vmatpush1.msra.mxu0 0.0
    %1976 = vmatprep.subr.mxu0 0.0
    %1977 = vmatpush1.msra.mxu0 0.0
    %1978 = vmatprep.subr.mxu0 0.0
    %1979 = vmatpush1.msra.mxu0 0.0
    %1980 = vmatprep.subr.mxu0 0.0
    %1981 = vmatpush1.msra.mxu0 0.0
    %1982 = vmatprep.subr.mxu0 0.0
    %1983 = vmatpush1.msra.mxu0 0.0
    %1984 = vmatprep.subr.mxu0 0.0
    %1985 = vmatpush1.msra.mxu0 0.0
    %1986 = vmatprep.mubr.f32.mxu0 0.0
    %1987 = vmatmul.mubr.f32.gmra.mrb[0].mxu0 %v1905
    %v1988 = vpop.f32.mrb[0].mxu0
    %v1989 = vadd.f32 0.0, %v1988
    %v1990 = vpop.f32.mrb[0].mxu0
    %1991 = vdwg.mxu0
    %1992 = vmatprep.subr.mxu0 0.0
    %1993 = vmatpush1.msra.mxu0 %v1889
    %1994 = vmatprep.subr.mxu0 0.0
    %1995 = vmatpush1.msra.mxu0 %v1890
    %1996 = vmatprep.subr.mxu0 0.0
    %1997 = vmatpush1.msra.mxu0 %v1891
    %1998 = vmatprep.subr.mxu0 0.0
    %1999 = vmatpush1.msra.mxu0 %v1892
    %2000 = vmatprep.subr.mxu0 0.0
    %2001 = vmatpush1.msra.mxu0 %v1893
    %2002 = vmatprep.subr.mxu0 0.0
    %2003 = vmatpush1.msra.mxu0 %v1894
    %2004 = vmatprep.subr.mxu0 0.0
    %2005 = vmatpush1.msra.mxu0 %v1895
    %2006 = vmatprep.subr.mxu0 0.0
    %2007 = vmatpush1.msra.mxu0 %v1896
    %2008 = vmatprep.subr.mxu0 0.0
    %2009 = vmatpush1.msra.mxu0 %v1897
    %2010 = vmatprep.subr.mxu0 0.0
    %2011 = vmatpush1.msra.mxu0 %v1898
    %2012 = vmatprep.subr.mxu0 0.0
    %2013 = vmatpush1.msra.mxu0 %v1899
    %2014 = vmatprep.subr.mxu0 0.0
    %2015 = vmatpush1.msra.mxu0 %v1900
    %2016 = vmatprep.subr.mxu0 0.0
    %2017 = vmatpush1.msra.mxu0 %v1901
    %2018 = vmatprep.subr.mxu0 0.0
    %2019 = vmatpush1.msra.mxu0 %v1902
    %2020 = vmatprep.subr.mxu0 0.0
    %2021 = vmatpush1.msra.mxu0 %v1903
    %2022 = vmatprep.subr.mxu0 0.0
    %2023 = vmatpush1.msra.mxu0 %v1904
    %2024 = vmatprep.subr.mxu0 0.0
    %2025 = vmatpush1.msra.mxu0 0.0
    %2026 = vmatprep.subr.mxu0 0.0
    %2027 = vmatpush1.msra.mxu0 0.0
    %2028 = vmatprep.subr.mxu0 0.0
    %2029 = vmatpush1.msra.mxu0 0.0
    %2030 = vmatprep.subr.mxu0 0.0
    %2031 = vmatpush1.msra.mxu0 0.0
    %2032 = vmatprep.subr.mxu0 0.0
    %2033 = vmatpush1.msra.mxu0 0.0
    %2034 = vmatprep.subr.mxu0 0.0
    %2035 = vmatpush1.msra.mxu0 0.0
    %2036 = vmatprep.subr.mxu0 0.0
    %2037 = vmatpush1.msra.mxu0 0.0
    %2038 = vmatprep.subr.mxu0 0.0
    %2039 = vmatpush1.msra.mxu0 0.0
    %2040 = vmatprep.subr.mxu0 0.0
    %2041 = vmatpush1.msra.mxu0 0.0
    %2042 = vmatprep.subr.mxu0 0.0
    %2043 = vmatpush1.msra.mxu0 0.0
    %2044 = vmatprep.subr.mxu0 0.0
    %2045 = vmatpush1.msra.mxu0 0.0
    %2046 = vmatprep.subr.mxu0 0.0
    %2047 = vmatpush1.msra.mxu0 0.0
    %2048 = vmatprep.subr.mxu0 0.0
    %2049 = vmatpush1.msra.mxu0 0.0
    %2050 = vmatprep.subr.mxu0 0.0
    %2051 = vmatpush1.msra.mxu0 0.0
    %2052 = vmatprep.subr.mxu0 0.0
    %2053 = vmatpush1.msra.mxu0 0.0
    %2054 = vmatprep.subr.mxu0 0.0
    %2055 = vmatpush1.msra.mxu0 0.0
    %2056 = vmatprep.mubr.f32.mxu0 0.0
    %2057 = vmatmul.mubr.f32.gmra.mrb[0].mxu0 %v1888
    %v2058 = vpop.f32.mrb[0].mxu0
    %v2059 = vadd.f32 %v1989, %v2058
    %v2060 = vpop.f32.mrb[0].mxu0
    %2061 = vdwg.mxu0
    %v2062 = vld [vmem:[%s7] sm:$0x1]
    %v2064 = vlaneseq
    %v2065 = vshrl.u32 %v2064, 7
    %v2066 = vsub.s32 0, %v2065
    %v2067 = vrot.slane %v2062, %v2066
    %v2069 = vadd.f32 %v2059, %v2067
    %2070 = vst [vmem:[%s8] sm:$0xff] %v2069
    // Predicated region
    $region42: #{instruction_following_forward.1} parent=1 // pred_check
      _
    $region43: #{instruction_following_forward.1} parent=1 // pred_check_branch
      %2072 = sbr.rel (0) target = $region45
    $region44: #{instruction_following_forward.1} parent=1 // pred_region
      _
    $region45: #{instruction_following_forward.1} parent=1 // pred_fallthru
      _
    // Predicated region
    $region46: #{instruction_following_forward.1} parent=1 // pred_check
      _
    $region47: #{instruction_following_forward.1} parent=1 // pred_check_branch
      %2074 = sbr.rel (0) target = $region49
    $region48: #{instruction_following_forward.1} parent=1 // pred_region
      _
    $region49: #{instruction_following_forward.1} parent=1 // pred_fallthru
      _
    %2075 = vsyncpa [#allocation4], 1
    %2076 = vsyncpa [#allocation6], 1

</llo_original>
